<compile_context>
chip_gen: v6e
topology: v6e:2x2x1
jax: 0.10.0
libtpu: 0.0.40
codegen_flags: <defaults>
</compile_context>

<pallas_src>
import numpy as np
import jax
import jax.numpy as jnp
from jax.experimental import pallas as pl
from jax.experimental.pallas import tpu as pltpu

N_PER_GRAPH = 558   # hardcoded `N = 558` inside the PyTorch forward
N_PAD = 640         # per-graph node padding (multiple of 128)


# --------------------------------------------------------------------------- #
# Pallas kernel: per-graph sparse aggregation  out = D_self*H + Mdst @ (Nsrc @ H)
# --------------------------------------------------------------------------- #
def _gcn_sparse_kernel(src_ref, dst_ref, nrm_ref, dsq_ref, h_ref, o_ref):
    # src_ref : (E, 1)  int32  edge source node (in-graph id), 0 for padding
    # dst_ref : (1, E)  int32  edge destination node, 0 for padding
    # nrm_ref : (E, 1)  f32    dinv[src]*w*dinv[dst], 0 for padding edges
    # dsq_ref : (NP,1)  f32    self-loop coefficient 1/deg (0 on padded nodes)
    # h_ref   : (NP,D)  f32    H = X @ W^T for this graph
    # o_ref   : (NP,D)  f32
    E = src_ref.shape[0]
    NP, D = h_ref.shape
    h = h_ref[...]

    # "gather" matrix: Nsrc[e, j] = norm_e * (j == src_e)              (E, NP)
    lane = jax.lax.broadcasted_iota(jnp.int32, (E, NP), 1)
    nsrc = jnp.where(lane == src_ref[...], nrm_ref[...], jnp.float32(0.0))
    p = jnp.dot(nsrc, h, preferred_element_type=jnp.float32)          # (E, D)

    # "scatter" matrix: Mdst[i, e] = (i == dst_e)                      (NP, E)
    row = jax.lax.broadcasted_iota(jnp.int32, (NP, E), 0)
    mdst = (row == dst_ref[...]).astype(jnp.float32)
    edges = jnp.dot(mdst, p, preferred_element_type=jnp.float32)      # (NP, D)

    # self-loop (diagonal) term + edge term; padded nodes have dsq == 0
    o_ref[...] = dsq_ref[...] * h + edges


def gcn_pallas_sparse(src_p, dst_p, nrm_p, dsq, h):
    """src_p:(S,E,1)i32  dst_p:(S,1,E)i32  nrm_p:(S,E,1)f32  dsq:(S,NP,1)f32  h:(S,NP,D)f32."""
    S, NP, D = h.shape
    E = src_p.shape[1]
    return pl.pallas_call(
        _gcn_sparse_kernel,
        out_shape=jax.ShapeDtypeStruct((S, NP, D), jnp.float32),
        grid_spec=pltpu.PrefetchScalarGridSpec(
            num_scalar_prefetch=0,
            grid=(S,),
            in_specs=[
                pl.BlockSpec((None, E, 1), lambda s: (s, 0, 0)),     # src
                pl.BlockSpec((None, 1, E), lambda s: (s, 0, 0)),     # dst
                pl.BlockSpec((None, E, 1), lambda s: (s, 0, 0)),     # norm
                pl.BlockSpec((None, NP, 1), lambda s: (s, 0, 0)),    # 1/deg
                pl.BlockSpec((None, NP, D), lambda s: (s, 0, 0)),    # H
            ],
            out_specs=pl.BlockSpec((None, NP, D), lambda s: (s, 0, 0)),
        ),
        compiler_params=pltpu.CompilerParams(
            dimension_semantics=("parallel",)),
    )(src_p, dst_p, nrm_p, dsq, h)


# --------------------------------------------------------------------------- #
# Preprocessing: per-graph edge lists, GCN norm and self-loop coefficients.
# No dense adjacency is ever materialized.
# --------------------------------------------------------------------------- #
def build_edge_data(edge_index, bond_dist, n, n_pad, e_pad):
    """PyG GCNConv gcn_norm (add_self_loops=True, improved=False), per graph.

    Padding edges (src == dst) get weight 0 (equivalent to the PyTorch code's
    stripping of trailing self-loop padding).  Bond distances are normalized
    by the max over all valid edges of the batch.
    """
    ei = jnp.asarray(edge_index, jnp.int32)        # (S, 2, B2)
    bd = jnp.asarray(bond_dist, jnp.float32)       # (S, B2)
    S, _, B2 = ei.shape
    src = ei[:, 0, :]
    dst = ei[:, 1, :]
    valid = src != dst

    wmax = jnp.max(jnp.where(valid, bd, -jnp.inf))
    wmax = jnp.maximum(wmax, jnp.float32(1e-12))   # guard: all-padding batch
    w = jnp.where(valid, bd / wmax, 0.0)

    # degree over destinations + unit self-loops for the n real nodes
    deg = jax.vmap(
        lambda idx, ww: jnp.zeros((n_pad,), jnp.float32).at[idx].add(ww)
    )(dst, w)
    deg = deg.at[:, :n].add(1.0)
    dinv = jnp.where(deg > 0, jax.lax.rsqrt(deg), 0.0)
    dsq = jnp.where(deg > 0, 1.0 / deg, 0.0)       # normalized self-loop weight

    norm = (jnp.take_along_axis(dinv, src, axis=1) * w *
            jnp.take_along_axis(dinv, dst, axis=1))          # (S, B2)

    # pad edge dim to e_pad with null edges (src=dst=0, norm=0 -> no effect)
    pad = e_pad - B2
    src_p = jnp.pad(src, ((0, 0), (0, pad)))
    dst_p = jnp.pad(dst, ((0, 0), (0, pad)))
    nrm_p = jnp.pad(norm, ((0, 0), (0, pad)))

    return (src_p[:, :, None],          # (S, E, 1) int32
            dst_p[:, None, :],          # (S, 1, E) int32
            nrm_p[:, :, None],          # (S, E, 1) f32
            dsq[:, :, None])            # (S, NP, 1) f32


def graph_conv_layer(x_data, edge_index, bond_dist, weight, bias):
    """Forward pass of GraphConvLayer. Returns (S*558, dim_out) float32."""
    S, N, F = x_data.shape
    assert N == N_PER_GRAPH, "module hardcodes 558 nodes per graph"
    dim_out = weight.shape[0]
    B2 = edge_index.shape[-1]
    E_PAD = max(128, ((B2 + 127) // 128) * 128)    # lane/sublane aligned edges

    src_p, dst_p, nrm_p, dsq = build_edge_data(
        edge_index, bond_dist, N_PER_GRAPH, N_PAD, E_PAD)

    x_p = jnp.zeros((S, N_PAD, F), jnp.float32).at[:, :N, :].set(
        jnp.asarray(x_data, jnp.float32))
    # Hoisted out of the kernel: H = X @ W^T (tiny, done once by XLA in f32;
    # HIGHEST is meaningful now that the whole path stays in f32).
    h = jnp.einsum('snf,of->sno', x_p, jnp.asarray(weight, jnp.float32),
                   precision=jax.lax.Precision.HIGHEST)

    out = gcn_pallas_sparse(src_p, dst_p, nrm_p, dsq, h)
    # bias in the XLA epilogue (padded rows leave the kernel exactly zero)
    out = out[:, :N, :] + jnp.asarray(bias, jnp.float32)[None, None, :]
    return out.reshape(S * N, dim_out)


# --------------------------------------------------------------------------- #
if __name__ == "__main__":
    dim_in, dim_out = 16, 32
    S, N, B2 = 2, N_PER_GRAPH, 64

    key = jax.random.PRNGKey(0)
    kx, ke, kw = jax.random.split(key, 3)

    x_data = jax.random.normal(kx, (S, N, dim_in), dtype=jnp.float32)

    # Synthetic edges: first `valid_counts[s]` edges have src != dst, the rest
    # are padding self-loops (src == dst), matching cumulative_edgeIndex.
    valid_counts = [48, 56]
    ei_list, bd_list = [], []
    for s in range(S):
        ks, kd, kb = jax.random.split(jax.random.fold_in(ke, s), 3)
        src = jax.random.randint(ks, (B2,), 0, N)
        r = jax.random.randint(kd, (B2,), 0, N - 1)
        dst_valid = (src + 1 + r) % N                   # guaranteed != src
        is_valid = jnp.arange(B2) < valid_counts[s]
        dst = jnp.where(is_valid, dst_valid, src)
        wgt = jax.random.uniform(kb, (B2,), minval=0.5, maxval=3.0)
        ei_list.append(jnp.stack([src, dst]))
        bd_list.append(wgt)
    edge_index = jnp.stack(ei_list).astype(jnp.int32)    # (S, 2, B2)
    bond_dist = jnp.stack(bd_list)                       # (S, B2)

    # GCNConv params: glorot weight (dim_out, dim_in), zero bias.
    limit = float(np.sqrt(6.0 / (dim_in + dim_out)))
    weight = jax.random.uniform(kw, (dim_out, dim_in), minval=-limit, maxval=limit,
                                dtype=jnp.float32)
    bias = jnp.zeros((dim_out,), jnp.float32)

    fwd = jax.jit(graph_conv_layer)
    out = fwd(x_data, edge_index, bond_dist, weight, bias)
    out = jax.block_until_ready(out)

    # ---- float64 numpy reference (original strip-first-b semantics) ---- #
    ei_np = np.asarray(edge_index)
    bd_np = np.asarray(bond_dist)
    src_all, dst_all, w_all = [], [], []
    for s in range(S):
        b = int(np.sum(ei_np[s, 0, :] != ei_np[s, 1, :]))
        src_all.append(ei_np[s, 0, :b] + s * N_PER_GRAPH)
        dst_all.append(ei_np[s, 1, :b] + s * N_PER_GRAPH)
        w_all.append(bd_np[s, :b])
    src_np = np.concatenate(src_all).astype(np.int64)
    dst_np = np.concatenate(dst_all).astype(np.int64)
    w64 = np.concatenate(w_all).astype(np.float64)
    w64 = w64 / w64.max()

    nn_tot = S * N_PER_GRAPH
    loop = np.arange(nn_tot)
    src_f = np.concatenate([src_np, loop])
    dst_f = np.concatenate([dst_np, loop])
    w_f = np.concatenate([w64, np.ones(nn_tot)])
    deg = np.zeros(nn_tot)
    np.add.at(deg, dst_f, w_f)
    dinv = np.where(deg > 0, 1.0 / np.sqrt(deg), 0.0)
    norm = dinv[src_f] * w_f * dinv[dst_f]
    A = np.zeros((nn_tot, nn_tot))
    np.add.at(A, (dst_f, src_f), norm)
    ref = A @ (np.asarray(x_data, np.float64).reshape(-1, dim_in)
               @ np.asarray(weight, np.float64).T) + np.asarray(bias, np.float64)

    assert out.shape == (nn_tot, dim_out)
    # f32 sparse path: much tighter than the old bf16 2e-2 tolerance.
    np.testing.assert_allclose(np.asarray(out, np.float64), ref, rtol=1e-2, atol=1e-2)
    print("KERNEL_OK")
</pallas_src>

<mosaic_0001>
module attributes {stable_mosaic.version = 11 : i64} {
  func.func private @main(%arg0: i32) attributes {dimension_semantics = [#tpu.dimension_semantics<core_parallel>], iteration_bounds = array<i64: 2>, tpu.core_type = #tpu.core_type<sc_scalar_subcore>, window_params = []} {
    return
  }
}

module attributes {stable_mosaic.version = 11 : i64} {
  func.func private @main(%arg0: i32) attributes {dimension_semantics = [#tpu.dimension_semantics<core_parallel>], iteration_bounds = array<i64: 2>, tpu.core_type = #tpu.core_type<sc_scalar_subcore>, window_params = []} {
    return
  }
}

module attributes {stable_mosaic.version = 11 : i64} {
  func.func @_gcn_sparse_kernel(%arg0: i32, %arg1: memref<1x128x1xi32, #tpu.memory_space<vmem>>, %arg2: memref<1x1x128xi32, #tpu.memory_space<vmem>>, %arg3: memref<1x128x1xf32, #tpu.memory_space<vmem>>, %arg4: memref<1x640x1xf32, #tpu.memory_space<vmem>>, %arg5: memref<1x640x32xf32, #tpu.memory_space<vmem>>, %arg6: memref<1x640x32xf32, #tpu.memory_space<vmem>>) attributes {dimension_semantics = [#tpu.dimension_semantics<parallel>], iteration_bounds = array<i64: 2>, scalar_prefetch = 0 : i64, scratch_operands = 0 : i64, tpu.core_type = #tpu.core_type<tc>, window_params = [{transform_indices = @transform_0, window_bounds = array<i64: 1, 128, 1>}, {transform_indices = @transform_1, window_bounds = array<i64: 1, 1, 128>}, {transform_indices = @transform_2, window_bounds = array<i64: 1, 128, 1>}, {transform_indices = @transform_3, window_bounds = array<i64: 1, 640, 1>}, {transform_indices = @transform_4, window_bounds = array<i64: 1, 640, 32>}, {transform_indices = @transform_5, window_bounds = array<i64: 1, 640, 32>}]} {
    %c0 = arith.constant 0 : index
    %c0_0 = arith.constant 0 : index
    %c0_1 = arith.constant 0 : index
    %0 = vector.load %arg5[%c0, %c0_0, %c0_1] : memref<1x640x32xf32, #tpu.memory_space<vmem>>, vector<1x640x32xf32>
    %1 = vector.shape_cast %0 : vector<1x640x32xf32> to vector<640x32xf32>
    %2 = tpu.iota {dimensions = array<i32: 1>} : vector<128x640xi32>
    %c0_2 = arith.constant 0 : index
    %c0_3 = arith.constant 0 : index
    %c0_4 = arith.constant 0 : index
    %3 = vector.load %arg1[%c0_2, %c0_3, %c0_4] : memref<1x128x1xi32, #tpu.memory_space<vmem>>, vector<1x128x1xi32>
    %4 = vector.shape_cast %3 : vector<1x128x1xi32> to vector<128x1xi32>
    %5 = vector.broadcast %4 : vector<128x1xi32> to vector<128x640xi32>
    %6 = arith.cmpi eq, %2, %5 : vector<128x640xi32>
    %c0_5 = arith.constant 0 : index
    %c0_6 = arith.constant 0 : index
    %c0_7 = arith.constant 0 : index
    %7 = vector.load %arg3[%c0_5, %c0_6, %c0_7] : memref<1x128x1xf32, #tpu.memory_space<vmem>>, vector<1x128x1xf32>
    %8 = vector.shape_cast %7 : vector<1x128x1xf32> to vector<128x1xf32>
    %cst = arith.constant 0.000000e+00 : f32
    %9 = vector.shape_cast %8 : vector<128x1xf32> to vector<128x1xf32>
    %10 = vector.broadcast %9 : vector<128x1xf32> to vector<128x640xf32>
    %11 = vector.broadcast %cst : f32 to vector<128x640xf32>
    %12 = arith.select %6, %10, %11 : vector<128x640xi1>, vector<128x640xf32>
    %cst_8 = arith.constant dense<0.000000e+00> : vector<128x32xf32>
    %13 = tpu.matmul %12, %1, %cst_8 {dimension_numbers = #tpu.dot_dimension_numbers<[1], [0], [0], [1], [0, 0, 1, 1], [], []>} : vector<128x640xf32>, vector<640x32xf32>, vector<128x32xf32> -> vector<128x32xf32>
    %14 = tpu.iota {dimensions = array<i32: 0>} : vector<640x128xi32>
    %c0_9 = arith.constant 0 : index
    %c0_10 = arith.constant 0 : index
    %c0_11 = arith.constant 0 : index
    %15 = vector.load %arg2[%c0_9, %c0_10, %c0_11] : memref<1x1x128xi32, #tpu.memory_space<vmem>>, vector<1x1x128xi32>
    %16 = vector.shape_cast %15 : vector<1x1x128xi32> to vector<1x128xi32>
    %17 = vector.broadcast %16 : vector<1x128xi32> to vector<640x128xi32>
    %18 = arith.cmpi eq, %14, %17 : vector<640x128xi32>
    %19 = arith.extui %18 : vector<640x128xi1> to vector<640x128xi32>
    %20 = arith.sitofp %19 : vector<640x128xi32> to vector<640x128xf32>
    %cst_12 = arith.constant dense<0.000000e+00> : vector<640x32xf32>
    %21 = tpu.matmul %20, %13, %cst_12 {dimension_numbers = #tpu.dot_dimension_numbers<[1], [0], [0], [1], [0, 0, 1, 1], [], []>} : vector<640x128xf32>, vector<128x32xf32>, vector<640x32xf32> -> vector<640x32xf32>
    %c0_13 = arith.constant 0 : index
    %c0_14 = arith.constant 0 : index
    %c0_15 = arith.constant 0 : index
    %22 = vector.load %arg4[%c0_13, %c0_14, %c0_15] : memref<1x640x1xf32, #tpu.memory_space<vmem>>, vector<1x640x1xf32>
    %23 = vector.shape_cast %22 : vector<1x640x1xf32> to vector<640x1xf32>
    %24 = vector.broadcast %23 : vector<640x1xf32> to vector<640x32xf32>
    %25 = arith.mulf %24, %1 : vector<640x32xf32>
    %26 = arith.addf %25, %21 : vector<640x32xf32>
    %c0_16 = arith.constant 0 : index
    %c0_17 = arith.constant 0 : index
    %c0_18 = arith.constant 0 : index
    %27 = vector.load %arg6[%c0_16, %c0_17, %c0_18] : memref<1x640x32xf32, #tpu.memory_space<vmem>>, vector<1x640x32xf32>
    %28 = vector.shape_cast %27 : vector<1x640x32xf32> to vector<640x32xf32>
    %29 = vector.shape_cast %26 : vector<640x32xf32> to vector<1x640x32xf32>
    tpu.vector_store %arg6[%c0_16, %c0_17, %c0_18], %29 {strides = array<i32>} : memref<1x640x32xf32, #tpu.memory_space<vmem>>, vector<1x640x32xf32>,
    return
  }
  func.func @transform_0(%arg0: i32) -> (i32, i32, i32) {
    %c0_i32 = arith.constant 0 : i32
    %c0_i32_0 = arith.constant 0 : i32
    %c0_i32_1 = arith.constant 0 : i32
    return %arg0, %c0_i32, %c0_i32_0 : i32, i32, i32
  }
  func.func @transform_1(%arg0: i32) -> (i32, i32, i32) {
    %c0_i32 = arith.constant 0 : i32
    %c0_i32_0 = arith.constant 0 : i32
    %c0_i32_1 = arith.constant 0 : i32
    return %arg0, %c0_i32, %c0_i32_0 : i32, i32, i32
  }
  func.func @transform_2(%arg0: i32) -> (i32, i32, i32) {
    %c0_i32 = arith.constant 0 : i32
    %c0_i32_0 = arith.constant 0 : i32
    %c0_i32_1 = arith.constant 0 : i32
    return %arg0, %c0_i32, %c0_i32_0 : i32, i32, i32
  }
  func.func @transform_3(%arg0: i32) -> (i32, i32, i32) {
    %c0_i32 = arith.constant 0 : i32
    %c0_i32_0 = arith.constant 0 : i32
    %c0_i32_1 = arith.constant 0 : i32
    return %arg0, %c0_i32, %c0_i32_0 : i32, i32, i32
  }
  func.func @transform_4(%arg0: i32) -> (i32, i32, i32) {
    %c0_i32 = arith.constant 0 : i32
    %c0_i32_0 = arith.constant 0 : i32
    %c0_i32_1 = arith.constant 0 : i32
    return %arg0, %c0_i32, %c0_i32_0 : i32, i32, i32
  }
  func.func @transform_5(%arg0: i32) -> (i32, i32, i32) {
    %c0_i32 = arith.constant 0 : i32
    %c0_i32_0 = arith.constant 0 : i32
    %c0_i32_1 = arith.constant 0 : i32
    return %arg0, %c0_i32, %c0_i32_0 : i32, i32, i32
  }
}

</mosaic_0001>

<llo_original>
// kernel: graph_conv_layer.1
$region0: #{graph_conv_layer.1}
  #allocation0 [shape = 'u32[]', space=smem, size = 0x4, offset = 0x4, fixed_abs, tag = 'smem constant byte address 0x4 - core index']
  #allocation1 [shape = 'u32[144,128]{1,0:T(1,128)}', space=vmem, size = 0x12000, scoped, tag = 'internal scratch']
  %s0 = inlined_call_operand.vmem [shape: s32[2,128,1], index: 0, kind: input, shape index: {}]
  %s1 = inlined_call_operand.vmem [shape: s32[2,1,128], index: 1, kind: input, shape index: {}]
  %s2 = inlined_call_operand.vmem [shape: f32[2,128,1], index: 2, kind: input, shape index: {}]
  %s3 = inlined_call_operand.vmem [shape: f32[2,640,1], index: 3, kind: input, shape index: {}]
  %s4 = inlined_call_operand.vmem [shape: f32[2,640,32], index: 4, kind: input, shape index: {}]
  %s5 = inlined_call_operand.vmem [shape: f32[2,640,32], index: 5, kind: output, shape index: {}]
  %s6 = sld [smem:[#allocation0]]
  $region53: #{graph_conv_layer.1} parent=0
    _
  %s8 = ssub.s32 1, %s6
  %s9 = scalar_select 0, %s8, %s6
  loop: start=0, step=1, limit=4
  $region2: #{graph_conv_layer.1} parent=0 // loop_pre_header
    _
  $region3: #{graph_conv_layer.1} parent=0 // loop_header
    %s11 = sphi 0, %s15
    %p12 = scmp.ge.s32.totalorder %s11, 4
    %s21 = sphi 0, %s23
    %s24 = sphi 0, %s21
    %s25 = sphi 0, %s24
    %s41 = sphi 0, %s25
    %s47 = sphi 0, %s49
    %s50 = sphi 0, %s47
    %s51 = sphi 0, %s50
    %s67 = sphi 0, %s51
    %s73 = sphi 0, %s75
    %s76 = sphi 0, %s73
    %s77 = sphi 0, %s76
    %s93 = sphi 0, %s77
    %s99 = sphi 0, %s101
    %s102 = sphi 0, %s99
    %s103 = sphi 0, %s102
    %s119 = sphi 0, %s103
    %s125 = sphi 0, %s127
    %s128 = sphi 0, %s125
    %s129 = sphi 0, %s128
    %s145 = sphi 0, %s129
    %s151 = sphi 0, %s153
    %s154 = sphi 0, %s151
    %s155 = sphi 0, %s154
    %s171 = sphi 0, %s155
  $region4: #{graph_conv_layer.1} parent=0 // loop_header_branch
    %14 = sbr.rel (%p12) target = $region8
  $region5: #{graph_conv_layer.1} parent=0 // loop_body
    %s16 = ssub.s32 %s11, 1
    %s17 = ssub.s32 %s11, 2
    %s18 = sadd.s32 %s11, 1
    %s19 = ssub.s32 %s11, %s18
    %p20 = scmp.eq.s32.totalorder %s19, 0
    %s22 = sadd.s32 %s21, 1
    %s23 = scalar_select %p20, %s21, %s22
    %p26 = pneg %p20
    %p27 = scmp.eq.s32.totalorder %s11, 1
    %p28 = por %p26, %p27
    %p29 = scmp.ne.s32.totalorder %s21, %s24
    %p30 = scmp.eq.s32.totalorder %s11, 0
    %p31 = por %p29, %p30
    %p32 = scmp.ne.s32.totalorder %s21, %s24
    %p33 = scmp.eq.s32.totalorder %s16, 1
    %p34 = por %p32, %p33
    %p35 = scmp.ne.s32.totalorder %s24, %s25
    %p36 = scmp.eq.s32.totalorder %s16, 0
    %p37 = por %p35, %p36
    %p38 = scmp.ne.s32.totalorder %s24, %s25
    %p39 = scmp.eq.s32.totalorder %s17, 1
    %p40 = por %p38, %p39
    %p42 = scmp.ne.s32.totalorder %s25, %s41
    %p43 = scmp.eq.s32.totalorder %s17, 0
    %p44 = por %p42, %p43
    %s45 = ssub.s32 %s11, %s18
    %p46 = scmp.eq.s32.totalorder %s45, 0
    %s48 = sadd.s32 %s47, 1
    %s49 = scalar_select %p46, %s47, %s48
    %p52 = pneg %p46
    %p53 = scmp.eq.s32.totalorder %s11, 1
    %p54 = por %p52, %p53
    %p55 = scmp.ne.s32.totalorder %s47, %s50
    %p56 = scmp.eq.s32.totalorder %s11, 0
    %p57 = por %p55, %p56
    %p58 = scmp.ne.s32.totalorder %s47, %s50
    %p59 = scmp.eq.s32.totalorder %s16, 1
    %p60 = por %p58, %p59
    %p61 = scmp.ne.s32.totalorder %s50, %s51
    %p62 = scmp.eq.s32.totalorder %s16, 0
    %p63 = por %p61, %p62
    %p64 = scmp.ne.s32.totalorder %s50, %s51
    %p65 = scmp.eq.s32.totalorder %s17, 1
    %p66 = por %p64, %p65
    %p68 = scmp.ne.s32.totalorder %s51, %s67
    %p69 = scmp.eq.s32.totalorder %s17, 0
    %p70 = por %p68, %p69
    %s71 = ssub.s32 %s11, %s18
    %p72 = scmp.eq.s32.totalorder %s71, 0
    %s74 = sadd.s32 %s73, 1
    %s75 = scalar_select %p72, %s73, %s74
    %p78 = pneg %p72
    %p79 = scmp.eq.s32.totalorder %s11, 1
    %p80 = por %p78, %p79
    %p81 = scmp.ne.s32.totalorder %s73, %s76
    %p82 = scmp.eq.s32.totalorder %s11, 0
    %p83 = por %p81, %p82
    %p84 = scmp.ne.s32.totalorder %s73, %s76
    %p85 = scmp.eq.s32.totalorder %s16, 1
    %p86 = por %p84, %p85
    %p87 = scmp.ne.s32.totalorder %s76, %s77
    %p88 = scmp.eq.s32.totalorder %s16, 0
    %p89 = por %p87, %p88
    %p90 = scmp.ne.s32.totalorder %s76, %s77
    %p91 = scmp.eq.s32.totalorder %s17, 1
    %p92 = por %p90, %p91
    %p94 = scmp.ne.s32.totalorder %s77, %s93
    %p95 = scmp.eq.s32.totalorder %s17, 0
    %p96 = por %p94, %p95
    %s97 = ssub.s32 %s11, %s18
    %p98 = scmp.eq.s32.totalorder %s97, 0
    %s100 = sadd.s32 %s99, 1
    %s101 = scalar_select %p98, %s99, %s100
    %p104 = pneg %p98
    %p105 = scmp.eq.s32.totalorder %s11, 1
    %p106 = por %p104, %p105
    %p107 = scmp.ne.s32.totalorder %s99, %s102
    %p108 = scmp.eq.s32.totalorder %s11, 0
    %p109 = por %p107, %p108
    %p110 = scmp.ne.s32.totalorder %s99, %s102
    %p111 = scmp.eq.s32.totalorder %s16, 1
    %p112 = por %p110, %p111
    %p113 = scmp.ne.s32.totalorder %s102, %s103
    %p114 = scmp.eq.s32.totalorder %s16, 0
    %p115 = por %p113, %p114
    %p116 = scmp.ne.s32.totalorder %s102, %s103
    %p117 = scmp.eq.s32.totalorder %s17, 1
    %p118 = por %p116, %p117
    %p120 = scmp.ne.s32.totalorder %s103, %s119
    %p121 = scmp.eq.s32.totalorder %s17, 0
    %p122 = por %p120, %p121
    %s123 = ssub.s32 %s11, %s18
    %p124 = scmp.eq.s32.totalorder %s123, 0
    %s126 = sadd.s32 %s125, 1
    %s127 = scalar_select %p124, %s125, %s126
    %p130 = pneg %p124
    %p131 = scmp.eq.s32.totalorder %s11, 1
    %p132 = por %p130, %p131
    %p133 = scmp.ne.s32.totalorder %s125, %s128
    %p134 = scmp.eq.s32.totalorder %s11, 0
    %p135 = por %p133, %p134
    %p136 = scmp.ne.s32.totalorder %s125, %s128
    %p137 = scmp.eq.s32.totalorder %s16, 1
    %p138 = por %p136, %p137
    %p139 = scmp.ne.s32.totalorder %s128, %s129
    %p140 = scmp.eq.s32.totalorder %s16, 0
    %p141 = por %p139, %p140
    %p142 = scmp.ne.s32.totalorder %s128, %s129
    %p143 = scmp.eq.s32.totalorder %s17, 1
    %p144 = por %p142, %p143
    %p146 = scmp.ne.s32.totalorder %s129, %s145
    %p147 = scmp.eq.s32.totalorder %s17, 0
    %p148 = por %p146, %p147
    %s149 = ssub.s32 %s11, %s18
    %p150 = scmp.eq.s32.totalorder %s149, 0
    %s152 = sadd.s32 %s151, 1
    %s153 = scalar_select %p150, %s151, %s152
    %p156 = pneg %p150
    %p157 = scmp.eq.s32.totalorder %s11, 1
    %p158 = por %p156, %p157
    %p159 = scmp.ne.s32.totalorder %s151, %s154
    %p160 = scmp.eq.s32.totalorder %s11, 0
    %p161 = por %p159, %p160
    %p162 = scmp.ne.s32.totalorder %s151, %s154
    %p163 = scmp.eq.s32.totalorder %s16, 1
    %p164 = por %p162, %p163
    %p165 = scmp.ne.s32.totalorder %s154, %s155
    %p166 = scmp.eq.s32.totalorder %s16, 0
    %p167 = por %p165, %p166
    %p168 = scmp.ne.s32.totalorder %s154, %s155
    %p169 = scmp.eq.s32.totalorder %s17, 1
    %p170 = por %p168, %p169
    %p172 = scmp.ne.s32.totalorder %s155, %s171
    %p173 = scmp.eq.s32.totalorder %s17, 0
    %p174 = por %p172, %p173
    %p175 = scmp.le.s32.totalorder 1, %s11
    %p176 = scmp.lt.s32.totalorder %s11, 3
    %p177 = pnand %p175, %p176
    %p178 = pneg %p177
    // Predicated region
    $region9: #{graph_conv_layer.1} parent=5 // pred_check
      _
    $region10: #{graph_conv_layer.1} parent=5 // pred_check_branch
      %180 = sbr.rel (%p177) target = $region12
    $region11: #{graph_conv_layer.1} parent=5 // pred_region
      %s181 = ssub.s32 %s11, 1
    $region12: #{graph_conv_layer.1} parent=5 // pred_fallthru
      _
    %p182 = scmp.lt.s32.totalorder %s11, 2
    // Predicated region
    $region13: #{graph_conv_layer.1} parent=5 // pred_check
      %p183 = pneg %p182
    $region14: #{graph_conv_layer.1} parent=5 // pred_check_branch
      %185 = sbr.rel (%p183) target = $region16
    $region15: #{graph_conv_layer.1} parent=5 // pred_region
      // Predicated region
      $region17: #{graph_conv_layer.1} parent=15 // pred_check
        %p186 = pneg %p31
      $region18: #{graph_conv_layer.1} parent=15 // pred_check_branch
        %188 = sbr.rel (%p186) target = $region20
      $region19: #{graph_conv_layer.1} parent=15 // pred_region
        %p189 = scmp.lt.s32.totalorder %s11, 1
        %s190 = scalar_select %p189, %s11, 1
        %s191 = smul.addr %s190, 16
        %s192 = smul.addr %s191, 8
        %s193 = scalar_lea.vmem %s0, %s192
      $region20: #{graph_conv_layer.1} parent=15 // pred_fallthru
        _
      // Predicated region
      $region21: #{graph_conv_layer.1} parent=15 // pred_check
        %p194 = pneg %p57
      $region22: #{graph_conv_layer.1} parent=15 // pred_check_branch
        %196 = sbr.rel (%p194) target = $region24
      $region23: #{graph_conv_layer.1} parent=15 // pred_region
        %p197 = scmp.lt.s32.totalorder %s11, 1
        %s198 = scalar_select %p197, %s11, 1
        %s199 = scalar_lea.vmem %s1, %s198
      $region24: #{graph_conv_layer.1} parent=15 // pred_fallthru
        _
      // Predicated region
      $region25: #{graph_conv_layer.1} parent=15 // pred_check
        %p200 = pneg %p83
      $region26: #{graph_conv_layer.1} parent=15 // pred_check_branch
        %202 = sbr.rel (%p200) target = $region28
      $region27: #{graph_conv_layer.1} parent=15 // pred_region
        %p203 = scmp.lt.s32.totalorder %s11, 1
        %s204 = scalar_select %p203, %s11, 1
        %s205 = smul.addr %s204, 16
        %s206 = smul.addr %s205, 8
        %s207 = scalar_lea.vmem %s2, %s206
      $region28: #{graph_conv_layer.1} parent=15 // pred_fallthru
        _
      // Predicated region
      $region29: #{graph_conv_layer.1} parent=15 // pred_check
        %p208 = pneg %p109
      $region30: #{graph_conv_layer.1} parent=15 // pred_check_branch
        %210 = sbr.rel (%p208) target = $region32
      $region31: #{graph_conv_layer.1} parent=15 // pred_region
        %p211 = scmp.lt.s32.totalorder %s11, 1
        %s212 = scalar_select %p211, %s11, 1
        %s213 = smul.addr %s212, 80
        %s214 = smul.addr %s213, 8
        %s215 = scalar_lea.vmem %s3, %s214
      $region32: #{graph_conv_layer.1} parent=15 // pred_fallthru
        _
      // Predicated region
      $region33: #{graph_conv_layer.1} parent=15 // pred_check
        %p216 = pneg %p135
      $region34: #{graph_conv_layer.1} parent=15 // pred_check_branch
        %218 = sbr.rel (%p216) target = $region36
      $region35: #{graph_conv_layer.1} parent=15 // pred_region
        %p219 = scmp.lt.s32.totalorder %s11, 1
        %s220 = scalar_select %p219, %s11, 1
        %s221 = smul.addr %s220, 80
        %s222 = smul.addr %s221, 8
        %s223 = scalar_lea.vmem %s4, %s222
      $region36: #{graph_conv_layer.1} parent=15 // pred_fallthru
        _
    $region16: #{graph_conv_layer.1} parent=5 // pred_fallthru
      _
    %p224 = scmp.le.s32.totalorder 1, %s11
    %p225 = scmp.lt.s32.totalorder %s11, 3
    %p226 = pnand %p224, %p225
    %p227 = pneg %p226
    // Predicated region
    $region37: #{graph_conv_layer.1} parent=5 // pred_check
      _
    $region38: #{graph_conv_layer.1} parent=5 // pred_check_branch
      %229 = sbr.rel (%p226) target = $region40
    $region39: #{graph_conv_layer.1} parent=5 // pred_region
      %s230 = ssub.s32 %s11, 1
      %p231 = scmp.lt.s32.totalorder %s16, 1
      %s232 = scalar_select %p231, %s16, 1
      %s233 = smul.addr %s232, 16
      %s234 = smul.addr %s233, 8
      %s235 = scalar_lea.vmem %s0, %s234
      %p236 = pneg %p37
      %p237 = pneg %p34
      %p238 = scmp.lt.s32.totalorder %s16, 1
      %s239 = scalar_select %p238, %s16, 1
      %s240 = scalar_lea.vmem %s1, %s239
      %p241 = pneg %p63
      %p242 = pneg %p60
      %p243 = scmp.lt.s32.totalorder %s16, 1
      %s244 = scalar_select %p243, %s16, 1
      %s245 = smul.addr %s244, 16
      %s246 = smul.addr %s245, 8
      %s247 = scalar_lea.vmem %s2, %s246
      %p248 = pneg %p89
      %p249 = pneg %p86
      %p250 = scmp.lt.s32.totalorder %s16, 1
      %s251 = scalar_select %p250, %s16, 1
      %s252 = smul.addr %s251, 80
      %s253 = smul.addr %s252, 8
      %s254 = scalar_lea.vmem %s3, %s253
      %p255 = pneg %p115
      %p256 = pneg %p112
      %p257 = scmp.lt.s32.totalorder %s16, 1
      %s258 = scalar_select %p257, %s16, 1
      %s259 = smul.addr %s258, 80
      %s260 = smul.addr %s259, 8
      %s261 = scalar_lea.vmem %s4, %s260
      %p262 = pneg %p141
      %p263 = pneg %p138
      %p264 = pneg %p167
      %p265 = pneg %p164
      %p266 = scmp.lt.s32.totalorder %s16, 1
      %s267 = scalar_select %p266, %s16, 1
      %s268 = smul.addr %s267, 80
      %s269 = smul.addr %s268, 8
      %s270 = scalar_lea.vmem %s5, %s269
      %p271 = scmp.lt.s32.totalorder %s16, 1
      %s272 = scalar_select %p271, %s16, 1
      %s273 = smul.addr %s272, 16
      %s274 = smul.addr %s273, 8
      %s275 = scalar_lea.vmem %s0, %s274
      %p276 = scmp.lt.s32.totalorder %s16, 1
      %s277 = scalar_select %p276, %s16, 1
      %s278 = scalar_lea.vmem %s1, %s277
      %p279 = scmp.lt.s32.totalorder %s16, 1
      %s280 = scalar_select %p279, %s16, 1
      %s281 = smul.addr %s280, 16
      %s282 = smul.addr %s281, 8
      %s283 = scalar_lea.vmem %s2, %s282
      %p284 = scmp.lt.s32.totalorder %s16, 1
      %s285 = scalar_select %p284, %s16, 1
      %s286 = smul.addr %s285, 80
      %s287 = smul.addr %s286, 8
      %s288 = scalar_lea.vmem %s3, %s287
      %p289 = scmp.lt.s32.totalorder %s16, 1
      %s290 = scalar_select %p289, %s16, 1
      %s291 = smul.addr %s290, 80
      %s292 = smul.addr %s291, 8
      %s293 = scalar_lea.vmem %s4, %s292
      %p294 = scmp.lt.s32.totalorder %s16, 1
      %s295 = scalar_select %p294, %s16, 1
      %s296 = smul.addr %s295, 80
      %s297 = smul.addr %s296, 8
      %s298 = scalar_lea.vmem %s5, %s297
      %v299 = vld [vmem:[%s293] sm:$0xff]
      %v300 = vld [vmem:[%s293 + $0x8] sm:$0xff]
      %v301 = vld [vmem:[%s293 + $0x10] sm:$0xff]
      %v302 = vld [vmem:[%s293 + $0x18] sm:$0xff]
      %v303 = vld [vmem:[%s293 + $0x20] sm:$0xff]
      %v304 = vld [vmem:[%s293 + $0x28] sm:$0xff]
      %v305 = vld [vmem:[%s293 + $0x30] sm:$0xff]
      %v306 = vld [vmem:[%s293 + $0x38] sm:$0xff]
      %v307 = vld [vmem:[%s293 + $0x40] sm:$0xff]
      %v308 = vld [vmem:[%s293 + $0x48] sm:$0xff]
      %v309 = vld [vmem:[%s293 + $0x50] sm:$0xff]
      %v310 = vld [vmem:[%s293 + $0x58] sm:$0xff]
      %v311 = vld [vmem:[%s293 + $0x60] sm:$0xff]
      %v312 = vld [vmem:[%s293 + $0x68] sm:$0xff]
      %v313 = vld [vmem:[%s293 + $0x70] sm:$0xff]
      %v314 = vld [vmem:[%s293 + $0x78] sm:$0xff]
      %v315 = vld [vmem:[%s293 + $0x80] sm:$0xff]
      %v316 = vld [vmem:[%s293 + $0x88] sm:$0xff]
      %v317 = vld [vmem:[%s293 + $0x90] sm:$0xff]
      %v318 = vld [vmem:[%s293 + $0x98] sm:$0xff]
      %v319 = vld [vmem:[%s293 + $0xa0] sm:$0xff]
      %v320 = vld [vmem:[%s293 + $0xa8] sm:$0xff]
      %v321 = vld [vmem:[%s293 + $0xb0] sm:$0xff]
      %v322 = vld [vmem:[%s293 + $0xb8] sm:$0xff]
      %v323 = vld [vmem:[%s293 + $0xc0] sm:$0xff]
      %v324 = vld [vmem:[%s293 + $0xc8] sm:$0xff]
      %v325 = vld [vmem:[%s293 + $0xd0] sm:$0xff]
      %v326 = vld [vmem:[%s293 + $0xd8] sm:$0xff]
      %v327 = vld [vmem:[%s293 + $0xe0] sm:$0xff]
      %v328 = vld [vmem:[%s293 + $0xe8] sm:$0xff]
      %v329 = vld [vmem:[%s293 + $0xf0] sm:$0xff]
      %v330 = vld [vmem:[%s293 + $0xf8] sm:$0xff]
      %v331 = vld [vmem:[%s293 + $0x100] sm:$0xff]
      %v332 = vld [vmem:[%s293 + $0x108] sm:$0xff]
      %v333 = vld [vmem:[%s293 + $0x110] sm:$0xff]
      %v334 = vld [vmem:[%s293 + $0x118] sm:$0xff]
      %v335 = vld [vmem:[%s293 + $0x120] sm:$0xff]
      %v336 = vld [vmem:[%s293 + $0x128] sm:$0xff]
      %v337 = vld [vmem:[%s293 + $0x130] sm:$0xff]
      %v338 = vld [vmem:[%s293 + $0x138] sm:$0xff]
      %v339 = vld [vmem:[%s293 + $0x140] sm:$0xff]
      %v340 = vld [vmem:[%s293 + $0x148] sm:$0xff]
      %v341 = vld [vmem:[%s293 + $0x150] sm:$0xff]
      %v342 = vld [vmem:[%s293 + $0x158] sm:$0xff]
      %v343 = vld [vmem:[%s293 + $0x160] sm:$0xff]
      %v344 = vld [vmem:[%s293 + $0x168] sm:$0xff]
      %v345 = vld [vmem:[%s293 + $0x170] sm:$0xff]
      %v346 = vld [vmem:[%s293 + $0x178] sm:$0xff]
      %v347 = vld [vmem:[%s293 + $0x180] sm:$0xff]
      %v348 = vld [vmem:[%s293 + $0x188] sm:$0xff]
      %v349 = vld [vmem:[%s293 + $0x190] sm:$0xff]
      %v350 = vld [vmem:[%s293 + $0x198] sm:$0xff]
      %v351 = vld [vmem:[%s293 + $0x1a0] sm:$0xff]
      %v352 = vld [vmem:[%s293 + $0x1a8] sm:$0xff]
      %v353 = vld [vmem:[%s293 + $0x1b0] sm:$0xff]
      %v354 = vld [vmem:[%s293 + $0x1b8] sm:$0xff]
      %v355 = vld [vmem:[%s293 + $0x1c0] sm:$0xff]
      %v356 = vld [vmem:[%s293 + $0x1c8] sm:$0xff]
      %v357 = vld [vmem:[%s293 + $0x1d0] sm:$0xff]
      %v358 = vld [vmem:[%s293 + $0x1d8] sm:$0xff]
      %v359 = vld [vmem:[%s293 + $0x1e0] sm:$0xff]
      %v360 = vld [vmem:[%s293 + $0x1e8] sm:$0xff]
      %v361 = vld [vmem:[%s293 + $0x1f0] sm:$0xff]
      %v362 = vld [vmem:[%s293 + $0x1f8] sm:$0xff]
      %v363 = vld [vmem:[%s293 + $0x200] sm:$0xff]
      %v364 = vld [vmem:[%s293 + $0x208] sm:$0xff]
      %v365 = vld [vmem:[%s293 + $0x210] sm:$0xff]
      %v366 = vld [vmem:[%s293 + $0x218] sm:$0xff]
      %v367 = vld [vmem:[%s293 + $0x220] sm:$0xff]
      %v368 = vld [vmem:[%s293 + $0x228] sm:$0xff]
      %v369 = vld [vmem:[%s293 + $0x230] sm:$0xff]
      %v370 = vld [vmem:[%s293 + $0x238] sm:$0xff]
      %v371 = vld [vmem:[%s293 + $0x240] sm:$0xff]
      %v372 = vld [vmem:[%s293 + $0x248] sm:$0xff]
      %v373 = vld [vmem:[%s293 + $0x250] sm:$0xff]
      %v374 = vld [vmem:[%s293 + $0x258] sm:$0xff]
      %v375 = vld [vmem:[%s293 + $0x260] sm:$0xff]
      %v376 = vld [vmem:[%s293 + $0x268] sm:$0xff]
      %v377 = vld [vmem:[%s293 + $0x270] sm:$0xff]
      %v378 = vld [vmem:[%s293 + $0x278] sm:$0xff]
      %v379 = vlaneseq
      %v380 = vand.u32 %v379, 127
      %v381 = vadd.s32 %v380, 128
      %v382 = vadd.s32 %v380, 256
      %v383 = vadd.s32 %v380, 384
      %v384 = vadd.s32 %v380, 512
      %v385 = vld [vmem:[%s275] sm:$0xff]
      %v386 = vld [vmem:[%s275 + $0x8] sm:$0xff]
      %v387 = vld [vmem:[%s275 + $0x10] sm:$0xff]
      %v388 = vld [vmem:[%s275 + $0x18] sm:$0xff]
      %v389 = vld [vmem:[%s275 + $0x20] sm:$0xff]
      %v390 = vld [vmem:[%s275 + $0x28] sm:$0xff]
      %v391 = vld [vmem:[%s275 + $0x30] sm:$0xff]
      %v392 = vld [vmem:[%s275 + $0x38] sm:$0xff]
      %v393 = vld [vmem:[%s275 + $0x40] sm:$0xff]
      %v394 = vld [vmem:[%s275 + $0x48] sm:$0xff]
      %v395 = vld [vmem:[%s275 + $0x50] sm:$0xff]
      %v396 = vld [vmem:[%s275 + $0x58] sm:$0xff]
      %v397 = vld [vmem:[%s275 + $0x60] sm:$0xff]
      %v398 = vld [vmem:[%s275 + $0x68] sm:$0xff]
      %v399 = vld [vmem:[%s275 + $0x70] sm:$0xff]
      %v400 = vld [vmem:[%s275 + $0x78] sm:$0xff]
      %401 = vset.pattern.permute.xlu0 0
      %402 = vperm.xlu0 %401, %v385
      %v403 = vpop.permute.xlu0 %402
      %404 = vset.pattern.permute.xlu0 0
      %405 = vperm.xlu0 %404, %v386
      %v406 = vpop.permute.xlu0 %405
      %407 = vset.pattern.permute.xlu0 0
      %408 = vperm.xlu0 %407, %v387
      %v409 = vpop.permute.xlu0 %408
      %410 = vset.pattern.permute.xlu0 0
      %411 = vperm.xlu0 %410, %v388
      %v412 = vpop.permute.xlu0 %411
      %413 = vset.pattern.permute.xlu0 0
      %414 = vperm.xlu0 %413, %v389
      %v415 = vpop.permute.xlu0 %414
      %416 = vset.pattern.permute.xlu0 0
      %417 = vperm.xlu0 %416, %v390
      %v418 = vpop.permute.xlu0 %417
      %419 = vset.pattern.permute.xlu0 0
      %420 = vperm.xlu0 %419, %v391
      %v421 = vpop.permute.xlu0 %420
      %422 = vset.pattern.permute.xlu0 0
      %423 = vperm.xlu0 %422, %v392
      %v424 = vpop.permute.xlu0 %423
      %425 = vset.pattern.permute.xlu0 0
      %426 = vperm.xlu0 %425, %v393
      %v427 = vpop.permute.xlu0 %426
      %428 = vset.pattern.permute.xlu0 0
      %429 = vperm.xlu0 %428, %v394
      %v430 = vpop.permute.xlu0 %429
      %431 = vset.pattern.permute.xlu0 0
      %432 = vperm.xlu0 %431, %v395
      %v433 = vpop.permute.xlu0 %432
      %434 = vset.pattern.permute.xlu0 0
      %435 = vperm.xlu0 %434, %v396
      %v436 = vpop.permute.xlu0 %435
      %437 = vset.pattern.permute.xlu0 0
      %438 = vperm.xlu0 %437, %v397
      %v439 = vpop.permute.xlu0 %438
      %440 = vset.pattern.permute.xlu0 0
      %441 = vperm.xlu0 %440, %v398
      %v442 = vpop.permute.xlu0 %441
      %443 = vset.pattern.permute.xlu0 0
      %444 = vperm.xlu0 %443, %v399
      %v445 = vpop.permute.xlu0 %444
      %446 = vset.pattern.permute.xlu0 0
      %447 = vperm.xlu0 %446, %v400
      %v448 = vpop.permute.xlu0 %447
      %vm449 = vcmp.eq.s32.totalorder %v380, %v403
      %vm450 = vcmp.eq.s32.totalorder %v381, %v403
      %vm451 = vcmp.eq.s32.totalorder %v382, %v403
      %vm452 = vcmp.eq.s32.totalorder %v383, %v403
      %vm453 = vcmp.eq.s32.totalorder %v384, %v403
      %vm454 = vcmp.eq.s32.totalorder %v380, %v406
      %vm455 = vcmp.eq.s32.totalorder %v381, %v406
      %vm456 = vcmp.eq.s32.totalorder %v382, %v406
      %vm457 = vcmp.eq.s32.totalorder %v383, %v406
      %vm458 = vcmp.eq.s32.totalorder %v384, %v406
      %vm459 = vcmp.eq.s32.totalorder %v380, %v409
      %vm460 = vcmp.eq.s32.totalorder %v381, %v409
      %vm461 = vcmp.eq.s32.totalorder %v382, %v409
      %vm462 = vcmp.eq.s32.totalorder %v383, %v409
      %vm463 = vcmp.eq.s32.totalorder %v384, %v409
      %vm464 = vcmp.eq.s32.totalorder %v380, %v412
      %vm465 = vcmp.eq.s32.totalorder %v381, %v412
      %vm466 = vcmp.eq.s32.totalorder %v382, %v412
      %vm467 = vcmp.eq.s32.totalorder %v383, %v412
      %vm468 = vcmp.eq.s32.totalorder %v384, %v412
      %vm469 = vcmp.eq.s32.totalorder %v380, %v415
      %vm470 = vcmp.eq.s32.totalorder %v381, %v415
      %vm471 = vcmp.eq.s32.totalorder %v382, %v415
      %vm472 = vcmp.eq.s32.totalorder %v383, %v415
      %vm473 = vcmp.eq.s32.totalorder %v384, %v415
      %vm474 = vcmp.eq.s32.totalorder %v380, %v418
      %vm475 = vcmp.eq.s32.totalorder %v381, %v418
      %vm476 = vcmp.eq.s32.totalorder %v382, %v418
      %vm477 = vcmp.eq.s32.totalorder %v383, %v418
      %vm478 = vcmp.eq.s32.totalorder %v384, %v418
      %vm479 = vcmp.eq.s32.totalorder %v380, %v421
      %vm480 = vcmp.eq.s32.totalorder %v381, %v421
      %vm481 = vcmp.eq.s32.totalorder %v382, %v421
      %vm482 = vcmp.eq.s32.totalorder %v383, %v421
      %vm483 = vcmp.eq.s32.totalorder %v384, %v421
      %vm484 = vcmp.eq.s32.totalorder %v380, %v424
      %vm485 = vcmp.eq.s32.totalorder %v381, %v424
      %vm486 = vcmp.eq.s32.totalorder %v382, %v424
      %vm487 = vcmp.eq.s32.totalorder %v383, %v424
      %vm488 = vcmp.eq.s32.totalorder %v384, %v424
      %vm489 = vcmp.eq.s32.totalorder %v380, %v427
      %vm490 = vcmp.eq.s32.totalorder %v381, %v427
      %vm491 = vcmp.eq.s32.totalorder %v382, %v427
      %vm492 = vcmp.eq.s32.totalorder %v383, %v427
      %vm493 = vcmp.eq.s32.totalorder %v384, %v427
      %vm494 = vcmp.eq.s32.totalorder %v380, %v430
      %vm495 = vcmp.eq.s32.totalorder %v381, %v430
      %vm496 = vcmp.eq.s32.totalorder %v382, %v430
      %vm497 = vcmp.eq.s32.totalorder %v383, %v430
      %vm498 = vcmp.eq.s32.totalorder %v384, %v430
      %vm499 = vcmp.eq.s32.totalorder %v380, %v433
      %vm500 = vcmp.eq.s32.totalorder %v381, %v433
      %vm501 = vcmp.eq.s32.totalorder %v382, %v433
      %vm502 = vcmp.eq.s32.totalorder %v383, %v433
      %vm503 = vcmp.eq.s32.totalorder %v384, %v433
      %vm504 = vcmp.eq.s32.totalorder %v380, %v436
      %vm505 = vcmp.eq.s32.totalorder %v381, %v436
      %vm506 = vcmp.eq.s32.totalorder %v382, %v436
      %vm507 = vcmp.eq.s32.totalorder %v383, %v436
      %vm508 = vcmp.eq.s32.totalorder %v384, %v436
      %vm509 = vcmp.eq.s32.totalorder %v380, %v439
      %vm510 = vcmp.eq.s32.totalorder %v381, %v439
      %vm511 = vcmp.eq.s32.totalorder %v382, %v439
      %vm512 = vcmp.eq.s32.totalorder %v383, %v439
      %vm513 = vcmp.eq.s32.totalorder %v384, %v439
      %vm514 = vcmp.eq.s32.totalorder %v380, %v442
      %vm515 = vcmp.eq.s32.totalorder %v381, %v442
      %vm516 = vcmp.eq.s32.totalorder %v382, %v442
      %vm517 = vcmp.eq.s32.totalorder %v383, %v442
      %vm518 = vcmp.eq.s32.totalorder %v384, %v442
      %vm519 = vcmp.eq.s32.totalorder %v380, %v445
      %vm520 = vcmp.eq.s32.totalorder %v381, %v445
      %vm521 = vcmp.eq.s32.totalorder %v382, %v445
      %vm522 = vcmp.eq.s32.totalorder %v383, %v445
      %vm523 = vcmp.eq.s32.totalorder %v384, %v445
      %vm524 = vcmp.eq.s32.totalorder %v380, %v448
      %vm525 = vcmp.eq.s32.totalorder %v381, %v448
      %vm526 = vcmp.eq.s32.totalorder %v382, %v448
      %vm527 = vcmp.eq.s32.totalorder %v383, %v448
      %vm528 = vcmp.eq.s32.totalorder %v384, %v448
      %v529 = vld [vmem:[%s283] sm:$0xff]
      %v530 = vld [vmem:[%s283 + $0x8] sm:$0xff]
      %v531 = vld [vmem:[%s283 + $0x10] sm:$0xff]
      %v532 = vld [vmem:[%s283 + $0x18] sm:$0xff]
      %v533 = vld [vmem:[%s283 + $0x20] sm:$0xff]
      %v534 = vld [vmem:[%s283 + $0x28] sm:$0xff]
      %v535 = vld [vmem:[%s283 + $0x30] sm:$0xff]
      %v536 = vld [vmem:[%s283 + $0x38] sm:$0xff]
      %v537 = vld [vmem:[%s283 + $0x40] sm:$0xff]
      %v538 = vld [vmem:[%s283 + $0x48] sm:$0xff]
      %v539 = vld [vmem:[%s283 + $0x50] sm:$0xff]
      %v540 = vld [vmem:[%s283 + $0x58] sm:$0xff]
      %v541 = vld [vmem:[%s283 + $0x60] sm:$0xff]
      %v542 = vld [vmem:[%s283 + $0x68] sm:$0xff]
      %v543 = vld [vmem:[%s283 + $0x70] sm:$0xff]
      %v544 = vld [vmem:[%s283 + $0x78] sm:$0xff]
      %546 = vset.pattern.permute.xlu0 0
      %547 = vperm.xlu0 %546, %v529
      %v548 = vpop.permute.xlu0 %547
      %551 = vset.pattern.permute.xlu0 0
      %552 = vperm.xlu0 %551, %v530
      %v553 = vpop.permute.xlu0 %552
      %556 = vset.pattern.permute.xlu0 0
      %557 = vperm.xlu0 %556, %v531
      %v558 = vpop.permute.xlu0 %557
      %561 = vset.pattern.permute.xlu0 0
      %562 = vperm.xlu0 %561, %v532
      %v563 = vpop.permute.xlu0 %562
      %566 = vset.pattern.permute.xlu0 0
      %567 = vperm.xlu0 %566, %v533
      %v568 = vpop.permute.xlu0 %567
      %571 = vset.pattern.permute.xlu0 0
      %572 = vperm.xlu0 %571, %v534
      %v573 = vpop.permute.xlu0 %572
      %576 = vset.pattern.permute.xlu0 0
      %577 = vperm.xlu0 %576, %v535
      %v578 = vpop.permute.xlu0 %577
      %581 = vset.pattern.permute.xlu0 0
      %582 = vperm.xlu0 %581, %v536
      %v583 = vpop.permute.xlu0 %582
      %586 = vset.pattern.permute.xlu0 0
      %587 = vperm.xlu0 %586, %v537
      %v588 = vpop.permute.xlu0 %587
      %591 = vset.pattern.permute.xlu0 0
      %592 = vperm.xlu0 %591, %v538
      %v593 = vpop.permute.xlu0 %592
      %596 = vset.pattern.permute.xlu0 0
      %597 = vperm.xlu0 %596, %v539
      %v598 = vpop.permute.xlu0 %597
      %601 = vset.pattern.permute.xlu0 0
      %602 = vperm.xlu0 %601, %v540
      %v603 = vpop.permute.xlu0 %602
      %606 = vset.pattern.permute.xlu0 0
      %607 = vperm.xlu0 %606, %v541
      %v608 = vpop.permute.xlu0 %607
      %611 = vset.pattern.permute.xlu0 0
      %612 = vperm.xlu0 %611, %v542
      %v613 = vpop.permute.xlu0 %612
      %616 = vset.pattern.permute.xlu0 0
      %617 = vperm.xlu0 %616, %v543
      %v618 = vpop.permute.xlu0 %617
      %621 = vset.pattern.permute.xlu0 0
      %622 = vperm.xlu0 %621, %v544
      %v623 = vpop.permute.xlu0 %622
      %v625 = vsel %vm449, %v548, 0.0
      %v626 = vsel %vm450, %v548, 0.0
      %v627 = vsel %vm451, %v548, 0.0
      %v628 = vsel %vm452, %v548, 0.0
      %v629 = vsel %vm453, %v548, 0.0
      %v630 = vsel %vm454, %v553, 0.0
      %v631 = vsel %vm455, %v553, 0.0
      %v632 = vsel %vm456, %v553, 0.0
      %v633 = vsel %vm457, %v553, 0.0
      %v634 = vsel %vm458, %v553, 0.0
      %v635 = vsel %vm459, %v558, 0.0
      %v636 = vsel %vm460, %v558, 0.0
      %v637 = vsel %vm461, %v558, 0.0
      %v638 = vsel %vm462, %v558, 0.0
      %v639 = vsel %vm463, %v558, 0.0
      %v640 = vsel %vm464, %v563, 0.0
      %v641 = vsel %vm465, %v563, 0.0
      %v642 = vsel %vm466, %v563, 0.0
      %v643 = vsel %vm467, %v563, 0.0
      %v644 = vsel %vm468, %v563, 0.0
      %v645 = vsel %vm469, %v568, 0.0
      %v646 = vsel %vm470, %v568, 0.0
      %v647 = vsel %vm471, %v568, 0.0
      %v648 = vsel %vm472, %v568, 0.0
      %v649 = vsel %vm473, %v568, 0.0
      %v650 = vsel %vm474, %v573, 0.0
      %v651 = vsel %vm475, %v573, 0.0
      %v652 = vsel %vm476, %v573, 0.0
      %v653 = vsel %vm477, %v573, 0.0
      %v654 = vsel %vm478, %v573, 0.0
      %v655 = vsel %vm479, %v578, 0.0
      %v656 = vsel %vm480, %v578, 0.0
      %v657 = vsel %vm481, %v578, 0.0
      %v658 = vsel %vm482, %v578, 0.0
      %v659 = vsel %vm483, %v578, 0.0
      %v660 = vsel %vm484, %v583, 0.0
      %v661 = vsel %vm485, %v583, 0.0
      %v662 = vsel %vm486, %v583, 0.0
      %v663 = vsel %vm487, %v583, 0.0
      %v664 = vsel %vm488, %v583, 0.0
      %v665 = vsel %vm489, %v588, 0.0
      %v666 = vsel %vm490, %v588, 0.0
      %v667 = vsel %vm491, %v588, 0.0
      %v668 = vsel %vm492, %v588, 0.0
      %v669 = vsel %vm493, %v588, 0.0
      %v670 = vsel %vm494, %v593, 0.0
      %v671 = vsel %vm495, %v593, 0.0
      %v672 = vsel %vm496, %v593, 0.0
      %v673 = vsel %vm497, %v593, 0.0
      %v674 = vsel %vm498, %v593, 0.0
      %v675 = vsel %vm499, %v598, 0.0
      %v676 = vsel %vm500, %v598, 0.0
      %v677 = vsel %vm501, %v598, 0.0
      %v678 = vsel %vm502, %v598, 0.0
      %v679 = vsel %vm503, %v598, 0.0
      %v680 = vsel %vm504, %v603, 0.0
      %v681 = vsel %vm505, %v603, 0.0
      %v682 = vsel %vm506, %v603, 0.0
      %v683 = vsel %vm507, %v603, 0.0
      %v684 = vsel %vm508, %v603, 0.0
      %v685 = vsel %vm509, %v608, 0.0
      %v686 = vsel %vm510, %v608, 0.0
      %v687 = vsel %vm511, %v608, 0.0
      %v688 = vsel %vm512, %v608, 0.0
      %v689 = vsel %vm513, %v608, 0.0
      %v690 = vsel %vm514, %v613, 0.0
      %v691 = vsel %vm515, %v613, 0.0
      %v692 = vsel %vm516, %v613, 0.0
      %v693 = vsel %vm517, %v613, 0.0
      %v694 = vsel %vm518, %v613, 0.0
      %v695 = vsel %vm519, %v618, 0.0
      %v696 = vsel %vm520, %v618, 0.0
      %v697 = vsel %vm521, %v618, 0.0
      %v698 = vsel %vm522, %v618, 0.0
      %v699 = vsel %vm523, %v618, 0.0
      %v700 = vsel %vm524, %v623, 0.0
      %v701 = vsel %vm525, %v623, 0.0
      %v702 = vsel %vm526, %v623, 0.0
      %v703 = vsel %vm527, %v623, 0.0
      %v704 = vsel %vm528, %v623, 0.0
      %705 = vmatprep.subr.mxu0 0.0
      %706 = vmatpush1.msra.mxu0 %v314
      %707 = vmatprep.subr.mxu0 0.0
      %708 = vmatpush1.msra.mxu0 %v313
      %709 = vmatprep.subr.mxu0 0.0
      %710 = vmatpush1.msra.mxu0 %v312
      %711 = vmatprep.subr.mxu0 0.0
      %712 = vmatpush1.msra.mxu0 %v311
      %713 = vmatprep.subr.mxu0 0.0
      %714 = vmatpush1.msra.mxu0 %v310
      %715 = vmatprep.subr.mxu0 0.0
      %716 = vmatpush1.msra.mxu0 %v309
      %717 = vmatprep.subr.mxu0 0.0
      %718 = vmatpush1.msra.mxu0 %v308
      %719 = vmatprep.subr.mxu0 0.0
      %720 = vmatpush1.msra.mxu0 %v307
      %721 = vmatprep.subr.mxu0 0.0
      %722 = vmatpush1.msra.mxu0 %v306
      %723 = vmatprep.subr.mxu0 0.0
      %724 = vmatpush1.msra.mxu0 %v305
      %725 = vmatprep.subr.mxu0 0.0
      %726 = vmatpush1.msra.mxu0 %v304
      %727 = vmatprep.subr.mxu0 0.0
      %728 = vmatpush1.msra.mxu0 %v303
      %729 = vmatprep.subr.mxu0 0.0
      %730 = vmatpush1.msra.mxu0 %v302
      %731 = vmatprep.subr.mxu0 0.0
      %732 = vmatpush1.msra.mxu0 %v301
      %733 = vmatprep.subr.mxu0 0.0
      %734 = vmatpush1.msra.mxu0 %v300
      %735 = vmatprep.subr.mxu0 0.0
      %736 = vmatpush1.msra.mxu0 %v299
      %737 = vmatprep.subr.mxu0 0.0
      %738 = vmatpush2.msra.mxu0 %v330
      %739 = vmatprep.subr.mxu0 0.0
      %740 = vmatpush2.msra.mxu0 %v329
      %741 = vmatprep.subr.mxu0 0.0
      %742 = vmatpush2.msra.mxu0 %v328
      %743 = vmatprep.subr.mxu0 0.0
      %744 = vmatpush2.msra.mxu0 %v327
      %745 = vmatprep.subr.mxu0 0.0
      %746 = vmatpush2.msra.mxu0 %v326
      %747 = vmatprep.subr.mxu0 0.0
      %748 = vmatpush2.msra.mxu0 %v325
      %749 = vmatprep.subr.mxu0 0.0
      %750 = vmatpush2.msra.mxu0 %v324
      %751 = vmatprep.subr.mxu0 0.0
      %752 = vmatpush2.msra.mxu0 %v323
      %753 = vmatprep.subr.mxu0 0.0
      %754 = vmatpush2.msra.mxu0 %v322
      %755 = vmatprep.subr.mxu0 0.0
      %756 = vmatpush2.msra.mxu0 %v321
      %757 = vmatprep.subr.mxu0 0.0
      %758 = vmatpush2.msra.mxu0 %v320
      %759 = vmatprep.subr.mxu0 0.0
      %760 = vmatpush2.msra.mxu0 %v319
      %761 = vmatprep.subr.mxu0 0.0
      %762 = vmatpush2.msra.mxu0 %v318
      %763 = vmatprep.subr.mxu0 0.0
      %764 = vmatpush2.msra.mxu0 %v317
      %765 = vmatprep.subr.mxu0 0.0
      %766 = vmatpush2.msra.mxu0 %v316
      %767 = vmatprep.subr.mxu0 0.0
      %768 = vmatpush2.msra.mxu0 %v315
      %769 = vmatprep.mubr.f32.mxu0 %v626
      %770 = vmatmul.mubr.f32.gmra.mxu0 %v625
      %v771 = vpop.f32.mrf.mxu0
      %v772 = vadd.f32 0.0, %v771
      %v773 = vpop.f32.mrf.mxu0
      %774 = vmatprep.mubr.f32.mxu0 %v631
      %775 = vmatmul.mubr.f32.gmra.mxu0 %v630
      %v776 = vpop.f32.mrf.mxu0
      %v777 = vadd.f32 0.0, %v776
      %v778 = vpop.f32.mrf.mxu0
      %779 = vmatprep.mubr.f32.mxu0 %v636
      %780 = vmatmul.mubr.f32.gmra.mxu0 %v635
      %v781 = vpop.f32.mrf.mxu0
      %v782 = vadd.f32 0.0, %v781
      %v783 = vpop.f32.mrf.mxu0
      %784 = vmatprep.mubr.f32.mxu0 %v641
      %785 = vmatmul.mubr.f32.gmra.mxu0 %v640
      %v786 = vpop.f32.mrf.mxu0
      %v787 = vadd.f32 0.0, %v786
      %v788 = vpop.f32.mrf.mxu0
      %789 = vmatprep.mubr.f32.mxu0 %v646
      %790 = vmatmul.mubr.f32.gmra.mxu0 %v645
      %v791 = vpop.f32.mrf.mxu0
      %v792 = vadd.f32 0.0, %v791
      %v793 = vpop.f32.mrf.mxu0
      %794 = vmatprep.mubr.f32.mxu0 %v651
      %795 = vmatmul.mubr.f32.gmra.mxu0 %v650
      %v796 = vpop.f32.mrf.mxu0
      %v797 = vadd.f32 0.0, %v796
      %v798 = vpop.f32.mrf.mxu0
      %799 = vmatprep.mubr.f32.mxu0 %v656
      %800 = vmatmul.mubr.f32.gmra.mxu0 %v655
      %v801 = vpop.f32.mrf.mxu0
      %v802 = vadd.f32 0.0, %v801
      %v803 = vpop.f32.mrf.mxu0
      %804 = vmatprep.mubr.f32.mxu0 %v661
      %805 = vmatmul.mubr.f32.gmra.mxu0 %v660
      %v806 = vpop.f32.mrf.mxu0
      %v807 = vadd.f32 0.0, %v806
      %v808 = vpop.f32.mrf.mxu0
      %809 = vmatprep.mubr.f32.mxu0 %v666
      %810 = vmatmul.mubr.f32.gmra.mxu0 %v665
      %v811 = vpop.f32.mrf.mxu0
      %v812 = vadd.f32 0.0, %v811
      %v813 = vpop.f32.mrf.mxu0
      %814 = vmatprep.mubr.f32.mxu0 %v671
      %815 = vmatmul.mubr.f32.gmra.mxu0 %v670
      %v816 = vpop.f32.mrf.mxu0
      %v817 = vadd.f32 0.0, %v816
      %v818 = vpop.f32.mrf.mxu0
      %819 = vmatprep.mubr.f32.mxu0 %v676
      %820 = vmatmul.mubr.f32.gmra.mxu0 %v675
      %v821 = vpop.f32.mrf.mxu0
      %v822 = vadd.f32 0.0, %v821
      %v823 = vpop.f32.mrf.mxu0
      %824 = vmatprep.mubr.f32.mxu0 %v681
      %825 = vmatmul.mubr.f32.gmra.mxu0 %v680
      %v826 = vpop.f32.mrf.mxu0
      %v827 = vadd.f32 0.0, %v826
      %v828 = vpop.f32.mrf.mxu0
      %829 = vmatprep.mubr.f32.mxu0 %v686
      %830 = vmatmul.mubr.f32.gmra.mxu0 %v685
      %v831 = vpop.f32.mrf.mxu0
      %v832 = vadd.f32 0.0, %v831
      %v833 = vpop.f32.mrf.mxu0
      %834 = vmatprep.mubr.f32.mxu0 %v691
      %835 = vmatmul.mubr.f32.gmra.mxu0 %v690
      %v836 = vpop.f32.mrf.mxu0
      %v837 = vadd.f32 0.0, %v836
      %v838 = vpop.f32.mrf.mxu0
      %839 = vmatprep.mubr.f32.mxu0 %v696
      %840 = vmatmul.mubr.f32.gmra.mxu0 %v695
      %v841 = vpop.f32.mrf.mxu0
      %v842 = vadd.f32 0.0, %v841
      %v843 = vpop.f32.mrf.mxu0
      %844 = vmatprep.mubr.f32.mxu0 %v701
      %845 = vmatmul.mubr.f32.gmra.mxu0 %v700
      %v846 = vpop.f32.mrf.mxu0
      %v847 = vadd.f32 0.0, %v846
      %v848 = vpop.f32.mrf.mxu0
      %849 = vdwg.mxu0
      %850 = vmatprep.subr.mxu0 0.0
      %851 = vmatpush1.msra.mxu0 %v346
      %852 = vmatprep.subr.mxu0 0.0
      %853 = vmatpush1.msra.mxu0 %v345
      %854 = vmatprep.subr.mxu0 0.0
      %855 = vmatpush1.msra.mxu0 %v344
      %856 = vmatprep.subr.mxu0 0.0
      %857 = vmatpush1.msra.mxu0 %v343
      %858 = vmatprep.subr.mxu0 0.0
      %859 = vmatpush1.msra.mxu0 %v342
      %860 = vmatprep.subr.mxu0 0.0
      %861 = vmatpush1.msra.mxu0 %v341
      %862 = vmatprep.subr.mxu0 0.0
      %863 = vmatpush1.msra.mxu0 %v340
      %864 = vmatprep.subr.mxu0 0.0
      %865 = vmatpush1.msra.mxu0 %v339
      %866 = vmatprep.subr.mxu0 0.0
      %867 = vmatpush1.msra.mxu0 %v338
      %868 = vmatprep.subr.mxu0 0.0
      %869 = vmatpush1.msra.mxu0 %v337
      %870 = vmatprep.subr.mxu0 0.0
      %871 = vmatpush1.msra.mxu0 %v336
      %872 = vmatprep.subr.mxu0 0.0
      %873 = vmatpush1.msra.mxu0 %v335
      %874 = vmatprep.subr.mxu0 0.0
      %875 = vmatpush1.msra.mxu0 %v334
      %876 = vmatprep.subr.mxu0 0.0
      %877 = vmatpush1.msra.mxu0 %v333
      %878 = vmatprep.subr.mxu0 0.0
      %879 = vmatpush1.msra.mxu0 %v332
      %880 = vmatprep.subr.mxu0 0.0
      %881 = vmatpush1.msra.mxu0 %v331
      %882 = vmatprep.subr.mxu0 0.0
      %883 = vmatpush2.msra.mxu0 %v362
      %884 = vmatprep.subr.mxu0 0.0
      %885 = vmatpush2.msra.mxu0 %v361
      %886 = vmatprep.subr.mxu0 0.0
      %887 = vmatpush2.msra.mxu0 %v360
      %888 = vmatprep.subr.mxu0 0.0
      %889 = vmatpush2.msra.mxu0 %v359
      %890 = vmatprep.subr.mxu0 0.0
      %891 = vmatpush2.msra.mxu0 %v358
      %892 = vmatprep.subr.mxu0 0.0
      %893 = vmatpush2.msra.mxu0 %v357
      %894 = vmatprep.subr.mxu0 0.0
      %895 = vmatpush2.msra.mxu0 %v356
      %896 = vmatprep.subr.mxu0 0.0
      %897 = vmatpush2.msra.mxu0 %v355
      %898 = vmatprep.subr.mxu0 0.0
      %899 = vmatpush2.msra.mxu0 %v354
      %900 = vmatprep.subr.mxu0 0.0
      %901 = vmatpush2.msra.mxu0 %v353
      %902 = vmatprep.subr.mxu0 0.0
      %903 = vmatpush2.msra.mxu0 %v352
      %904 = vmatprep.subr.mxu0 0.0
      %905 = vmatpush2.msra.mxu0 %v351
      %906 = vmatprep.subr.mxu0 0.0
      %907 = vmatpush2.msra.mxu0 %v350
      %908 = vmatprep.subr.mxu0 0.0
      %909 = vmatpush2.msra.mxu0 %v349
      %910 = vmatprep.subr.mxu0 0.0
      %911 = vmatpush2.msra.mxu0 %v348
      %912 = vmatprep.subr.mxu0 0.0
      %913 = vmatpush2.msra.mxu0 %v347
      %914 = vmatprep.mubr.f32.mxu0 %v628
      %915 = vmatmul.mubr.f32.gmra.mxu0 %v627
      %v916 = vpop.f32.mrf.mxu0
      %v917 = vadd.f32 %v772, %v916
      %v918 = vpop.f32.mrf.mxu0
      %919 = vmatprep.mubr.f32.mxu0 %v633
      %920 = vmatmul.mubr.f32.gmra.mxu0 %v632
      %v921 = vpop.f32.mrf.mxu0
      %v922 = vadd.f32 %v777, %v921
      %v923 = vpop.f32.mrf.mxu0
      %924 = vmatprep.mubr.f32.mxu0 %v638
      %925 = vmatmul.mubr.f32.gmra.mxu0 %v637
      %v926 = vpop.f32.mrf.mxu0
      %v927 = vadd.f32 %v782, %v926
      %v928 = vpop.f32.mrf.mxu0
      %929 = vmatprep.mubr.f32.mxu0 %v643
      %930 = vmatmul.mubr.f32.gmra.mxu0 %v642
      %v931 = vpop.f32.mrf.mxu0
      %v932 = vadd.f32 %v787, %v931
      %v933 = vpop.f32.mrf.mxu0
      %934 = vmatprep.mubr.f32.mxu0 %v648
      %935 = vmatmul.mubr.f32.gmra.mxu0 %v647
      %v936 = vpop.f32.mrf.mxu0
      %v937 = vadd.f32 %v792, %v936
      %v938 = vpop.f32.mrf.mxu0
      %939 = vmatprep.mubr.f32.mxu0 %v653
      %940 = vmatmul.mubr.f32.gmra.mxu0 %v652
      %v941 = vpop.f32.mrf.mxu0
      %v942 = vadd.f32 %v797, %v941
      %v943 = vpop.f32.mrf.mxu0
      %944 = vmatprep.mubr.f32.mxu0 %v658
      %945 = vmatmul.mubr.f32.gmra.mxu0 %v657
      %v946 = vpop.f32.mrf.mxu0
      %v947 = vadd.f32 %v802, %v946
      %v948 = vpop.f32.mrf.mxu0
      %949 = vmatprep.mubr.f32.mxu0 %v663
      %950 = vmatmul.mubr.f32.gmra.mxu0 %v662
      %v951 = vpop.f32.mrf.mxu0
      %v952 = vadd.f32 %v807, %v951
      %v953 = vpop.f32.mrf.mxu0
      %954 = vmatprep.mubr.f32.mxu0 %v668
      %955 = vmatmul.mubr.f32.gmra.mxu0 %v667
      %v956 = vpop.f32.mrf.mxu0
      %v957 = vadd.f32 %v812, %v956
      %v958 = vpop.f32.mrf.mxu0
      %959 = vmatprep.mubr.f32.mxu0 %v673
      %960 = vmatmul.mubr.f32.gmra.mxu0 %v672
      %v961 = vpop.f32.mrf.mxu0
      %v962 = vadd.f32 %v817, %v961
      %v963 = vpop.f32.mrf.mxu0
      %964 = vmatprep.mubr.f32.mxu0 %v678
      %965 = vmatmul.mubr.f32.gmra.mxu0 %v677
      %v966 = vpop.f32.mrf.mxu0
      %v967 = vadd.f32 %v822, %v966
      %v968 = vpop.f32.mrf.mxu0
      %969 = vmatprep.mubr.f32.mxu0 %v683
      %970 = vmatmul.mubr.f32.gmra.mxu0 %v682
      %v971 = vpop.f32.mrf.mxu0
      %v972 = vadd.f32 %v827, %v971
      %v973 = vpop.f32.mrf.mxu0
      %974 = vmatprep.mubr.f32.mxu0 %v688
      %975 = vmatmul.mubr.f32.gmra.mxu0 %v687
      %v976 = vpop.f32.mrf.mxu0
      %v977 = vadd.f32 %v832, %v976
      %v978 = vpop.f32.mrf.mxu0
      %979 = vmatprep.mubr.f32.mxu0 %v693
      %980 = vmatmul.mubr.f32.gmra.mxu0 %v692
      %v981 = vpop.f32.mrf.mxu0
      %v982 = vadd.f32 %v837, %v981
      %v983 = vpop.f32.mrf.mxu0
      %984 = vmatprep.mubr.f32.mxu0 %v698
      %985 = vmatmul.mubr.f32.gmra.mxu0 %v697
      %v986 = vpop.f32.mrf.mxu0
      %v987 = vadd.f32 %v842, %v986
      %v988 = vpop.f32.mrf.mxu0
      %989 = vmatprep.mubr.f32.mxu0 %v703
      %990 = vmatmul.mubr.f32.gmra.mxu0 %v702
      %v991 = vpop.f32.mrf.mxu0
      %v992 = vadd.f32 %v847, %v991
      %v993 = vpop.f32.mrf.mxu0
      %994 = vdwg.mxu0
      %995 = vmatprep.subr.mxu0 0.0
      %996 = vmatpush1.msra.mxu0 %v378
      %997 = vmatprep.subr.mxu0 0.0
      %998 = vmatpush1.msra.mxu0 %v377
      %999 = vmatprep.subr.mxu0 0.0
      %1000 = vmatpush1.msra.mxu0 %v376
      %1001 = vmatprep.subr.mxu0 0.0
      %1002 = vmatpush1.msra.mxu0 %v375
      %1003 = vmatprep.subr.mxu0 0.0
      %1004 = vmatpush1.msra.mxu0 %v374
      %1005 = vmatprep.subr.mxu0 0.0
      %1006 = vmatpush1.msra.mxu0 %v373
      %1007 = vmatprep.subr.mxu0 0.0
      %1008 = vmatpush1.msra.mxu0 %v372
      %1009 = vmatprep.subr.mxu0 0.0
      %1010 = vmatpush1.msra.mxu0 %v371
      %1011 = vmatprep.subr.mxu0 0.0
      %1012 = vmatpush1.msra.mxu0 %v370
      %1013 = vmatprep.subr.mxu0 0.0
      %1014 = vmatpush1.msra.mxu0 %v369
      %1015 = vmatprep.subr.mxu0 0.0
      %1016 = vmatpush1.msra.mxu0 %v368
      %1017 = vmatprep.subr.mxu0 0.0
      %1018 = vmatpush1.msra.mxu0 %v367
      %1019 = vmatprep.subr.mxu0 0.0
      %1020 = vmatpush1.msra.mxu0 %v366
      %1021 = vmatprep.subr.mxu0 0.0
      %1022 = vmatpush1.msra.mxu0 %v365
      %1023 = vmatprep.subr.mxu0 0.0
      %1024 = vmatpush1.msra.mxu0 %v364
      %1025 = vmatprep.subr.mxu0 0.0
      %1026 = vmatpush1.msra.mxu0 %v363
      %1027 = vmatprep.subr.mxu0 0.0
      %1028 = vmatpush2.msra.mxu0 0.0
      %1029 = vmatprep.subr.mxu0 0.0
      %1030 = vmatpush2.msra.mxu0 0.0
      %1031 = vmatprep.subr.mxu0 0.0
      %1032 = vmatpush2.msra.mxu0 0.0
      %1033 = vmatprep.subr.mxu0 0.0
      %1034 = vmatpush2.msra.mxu0 0.0
      %1035 = vmatprep.subr.mxu0 0.0
      %1036 = vmatpush2.msra.mxu0 0.0
      %1037 = vmatprep.subr.mxu0 0.0
      %1038 = vmatpush2.msra.mxu0 0.0
      %1039 = vmatprep.subr.mxu0 0.0
      %1040 = vmatpush2.msra.mxu0 0.0
      %1041 = vmatprep.subr.mxu0 0.0
      %1042 = vmatpush2.msra.mxu0 0.0
      %1043 = vmatprep.subr.mxu0 0.0
      %1044 = vmatpush2.msra.mxu0 0.0
      %1045 = vmatprep.subr.mxu0 0.0
      %1046 = vmatpush2.msra.mxu0 0.0
      %1047 = vmatprep.subr.mxu0 0.0
      %1048 = vmatpush2.msra.mxu0 0.0
      %1049 = vmatprep.subr.mxu0 0.0
      %1050 = vmatpush2.msra.mxu0 0.0
      %1051 = vmatprep.subr.mxu0 0.0
      %1052 = vmatpush2.msra.mxu0 0.0
      %1053 = vmatprep.subr.mxu0 0.0
      %1054 = vmatpush2.msra.mxu0 0.0
      %1055 = vmatprep.subr.mxu0 0.0
      %1056 = vmatpush2.msra.mxu0 0.0
      %1057 = vmatprep.subr.mxu0 0.0
      %1058 = vmatpush2.msra.mxu0 0.0
      %1059 = vmatprep.mubr.f32.mxu0 0.0
      %1060 = vmatmul.mubr.f32.gmra.mxu0 %v629
      %v1061 = vpop.f32.mrf.mxu0
      %v1062 = vadd.f32 %v917, %v1061
      %v1063 = vpop.f32.mrf.mxu0
      %1064 = vmatprep.mubr.f32.mxu0 0.0
      %1065 = vmatmul.mubr.f32.gmra.mxu0 %v634
      %v1066 = vpop.f32.mrf.mxu0
      %v1067 = vadd.f32 %v922, %v1066
      %v1068 = vpop.f32.mrf.mxu0
      %1069 = vmatprep.mubr.f32.mxu0 0.0
      %1070 = vmatmul.mubr.f32.gmra.mxu0 %v639
      %v1071 = vpop.f32.mrf.mxu0
      %v1072 = vadd.f32 %v927, %v1071
      %v1073 = vpop.f32.mrf.mxu0
      %1074 = vmatprep.mubr.f32.mxu0 0.0
      %1075 = vmatmul.mubr.f32.gmra.mxu0 %v644
      %v1076 = vpop.f32.mrf.mxu0
      %v1077 = vadd.f32 %v932, %v1076
      %v1078 = vpop.f32.mrf.mxu0
      %1079 = vmatprep.mubr.f32.mxu0 0.0
      %1080 = vmatmul.mubr.f32.gmra.mxu0 %v649
      %v1081 = vpop.f32.mrf.mxu0
      %v1082 = vadd.f32 %v937, %v1081
      %v1083 = vpop.f32.mrf.mxu0
      %1084 = vmatprep.mubr.f32.mxu0 0.0
      %1085 = vmatmul.mubr.f32.gmra.mxu0 %v654
      %v1086 = vpop.f32.mrf.mxu0
      %v1087 = vadd.f32 %v942, %v1086
      %v1088 = vpop.f32.mrf.mxu0
      %1089 = vmatprep.mubr.f32.mxu0 0.0
      %1090 = vmatmul.mubr.f32.gmra.mxu0 %v659
      %v1091 = vpop.f32.mrf.mxu0
      %v1092 = vadd.f32 %v947, %v1091
      %v1093 = vpop.f32.mrf.mxu0
      %1094 = vmatprep.mubr.f32.mxu0 0.0
      %1095 = vmatmul.mubr.f32.gmra.mxu0 %v664
      %v1096 = vpop.f32.mrf.mxu0
      %v1097 = vadd.f32 %v952, %v1096
      %v1098 = vpop.f32.mrf.mxu0
      %1099 = vmatprep.mubr.f32.mxu0 0.0
      %1100 = vmatmul.mubr.f32.gmra.mxu0 %v669
      %v1101 = vpop.f32.mrf.mxu0
      %v1102 = vadd.f32 %v957, %v1101
      %v1103 = vpop.f32.mrf.mxu0
      %1104 = vmatprep.mubr.f32.mxu0 0.0
      %1105 = vmatmul.mubr.f32.gmra.mxu0 %v674
      %v1106 = vpop.f32.mrf.mxu0
      %v1107 = vadd.f32 %v962, %v1106
      %v1108 = vpop.f32.mrf.mxu0
      %1109 = vmatprep.mubr.f32.mxu0 0.0
      %1110 = vmatmul.mubr.f32.gmra.mxu0 %v679
      %v1111 = vpop.f32.mrf.mxu0
      %v1112 = vadd.f32 %v967, %v1111
      %v1113 = vpop.f32.mrf.mxu0
      %1114 = vmatprep.mubr.f32.mxu0 0.0
      %1115 = vmatmul.mubr.f32.gmra.mxu0 %v684
      %v1116 = vpop.f32.mrf.mxu0
      %v1117 = vadd.f32 %v972, %v1116
      %v1118 = vpop.f32.mrf.mxu0
      %1119 = vmatprep.mubr.f32.mxu0 0.0
      %1120 = vmatmul.mubr.f32.gmra.mxu0 %v689
      %v1121 = vpop.f32.mrf.mxu0
      %v1122 = vadd.f32 %v977, %v1121
      %v1123 = vpop.f32.mrf.mxu0
      %1124 = vmatprep.mubr.f32.mxu0 0.0
      %1125 = vmatmul.mubr.f32.gmra.mxu0 %v694
      %v1126 = vpop.f32.mrf.mxu0
      %v1127 = vadd.f32 %v982, %v1126
      %v1128 = vpop.f32.mrf.mxu0
      %1129 = vmatprep.mubr.f32.mxu0 0.0
      %1130 = vmatmul.mubr.f32.gmra.mxu0 %v699
      %v1131 = vpop.f32.mrf.mxu0
      %v1132 = vadd.f32 %v987, %v1131
      %v1133 = vpop.f32.mrf.mxu0
      %1134 = vmatprep.mubr.f32.mxu0 0.0
      %1135 = vmatmul.mubr.f32.gmra.mxu0 %v704
      %v1136 = vpop.f32.mrf.mxu0
      %v1137 = vadd.f32 %v992, %v1136
      %v1138 = vpop.f32.mrf.mxu0
      %1139 = vdwg.mxu0
      %v1140 = vlaneseq
      %v1141 = vshrl.u32 %v1140, 7
      %v1142 = vadd.s32 %v1141, 8
      %v1143 = vadd.s32 %v1141, 16
      %v1144 = vadd.s32 %v1141, 24
      %v1145 = vadd.s32 %v1141, 32
      %v1146 = vadd.s32 %v1141, 40
      %v1147 = vadd.s32 %v1141, 48
      %v1148 = vadd.s32 %v1141, 56
      %v1149 = vadd.s32 %v1141, 64
      %v1150 = vadd.s32 %v1141, 72
      %v1151 = vadd.s32 %v1141, 80
      %v1152 = vadd.s32 %v1141, 88
      %v1153 = vadd.s32 %v1141, 96
      %v1154 = vadd.s32 %v1141, 104
      %v1155 = vadd.s32 %v1141, 112
      %v1156 = vadd.s32 %v1141, 120
      %v1157 = vadd.s32 %v1141, 128
      %v1158 = vadd.s32 %v1141, 136
      %v1159 = vadd.s32 %v1141, 144
      %v1160 = vadd.s32 %v1141, 152
      %v1161 = vadd.s32 %v1141, 160
      %v1162 = vadd.s32 %v1141, 168
      %v1163 = vadd.s32 %v1141, 176
      %v1164 = vadd.s32 %v1141, 184
      %v1165 = vadd.s32 %v1141, 192
      %v1166 = vadd.s32 %v1141, 200
      %v1167 = vadd.s32 %v1141, 208
      %v1168 = vadd.s32 %v1141, 216
      %v1169 = vadd.s32 %v1141, 224
      %v1170 = vadd.s32 %v1141, 232
      %v1171 = vadd.s32 %v1141, 240
      %v1172 = vadd.s32 %v1141, 248
      %v1173 = vadd.s32 %v1141, 256
      %v1174 = vadd.s32 %v1141, 264
      %v1175 = vadd.s32 %v1141, 272
      %v1176 = vadd.s32 %v1141, 280
      %v1177 = vadd.s32 %v1141, 288
      %v1178 = vadd.s32 %v1141, 296
      %v1179 = vadd.s32 %v1141, 304
      %v1180 = vadd.s32 %v1141, 312
      %v1181 = vadd.s32 %v1141, 320
      %v1182 = vadd.s32 %v1141, 328
      %v1183 = vadd.s32 %v1141, 336
      %v1184 = vadd.s32 %v1141, 344
      %v1185 = vadd.s32 %v1141, 352
      %v1186 = vadd.s32 %v1141, 360
      %v1187 = vadd.s32 %v1141, 368
      %v1188 = vadd.s32 %v1141, 376
      %v1189 = vadd.s32 %v1141, 384
      %v1190 = vadd.s32 %v1141, 392
      %v1191 = vadd.s32 %v1141, 400
      %v1192 = vadd.s32 %v1141, 408
      %v1193 = vadd.s32 %v1141, 416
      %v1194 = vadd.s32 %v1141, 424
      %v1195 = vadd.s32 %v1141, 432
      %v1196 = vadd.s32 %v1141, 440
      %v1197 = vadd.s32 %v1141, 448
      %v1198 = vadd.s32 %v1141, 456
      %v1199 = vadd.s32 %v1141, 464
      %v1200 = vadd.s32 %v1141, 472
      %v1201 = vadd.s32 %v1141, 480
      %v1202 = vadd.s32 %v1141, 488
      %v1203 = vadd.s32 %v1141, 496
      %v1204 = vadd.s32 %v1141, 504
      %v1205 = vadd.s32 %v1141, 512
      %v1206 = vadd.s32 %v1141, 520
      %v1207 = vadd.s32 %v1141, 528
      %v1208 = vadd.s32 %v1141, 536
      %v1209 = vadd.s32 %v1141, 544
      %v1210 = vadd.s32 %v1141, 552
      %v1211 = vadd.s32 %v1141, 560
      %v1212 = vadd.s32 %v1141, 568
      %v1213 = vadd.s32 %v1141, 576
      %v1214 = vadd.s32 %v1141, 584
      %v1215 = vadd.s32 %v1141, 592
      %v1216 = vadd.s32 %v1141, 600
      %v1217 = vadd.s32 %v1141, 608
      %v1218 = vadd.s32 %v1141, 616
      %v1219 = vadd.s32 %v1141, 624
      %v1220 = vadd.s32 %v1141, 632
      %v1221 = vld [vmem:[%s278] sm:$0x1]
      %v1222 = vlaneseq
      %v1223 = vshrl.u32 %v1222, 7
      %v1224 = vsub.s32 0, %v1223
      %v1225 = vrot.slane %v1221, %v1224
      %vm1226 = vcmp.eq.s32.totalorder %v1141, %v1225
      %vm1227 = vcmp.eq.s32.totalorder %v1142, %v1225
      %vm1228 = vcmp.eq.s32.totalorder %v1143, %v1225
      %vm1229 = vcmp.eq.s32.totalorder %v1144, %v1225
      %vm1230 = vcmp.eq.s32.totalorder %v1145, %v1225
      %vm1231 = vcmp.eq.s32.totalorder %v1146, %v1225
      %vm1232 = vcmp.eq.s32.totalorder %v1147, %v1225
      %vm1233 = vcmp.eq.s32.totalorder %v1148, %v1225
      %vm1234 = vcmp.eq.s32.totalorder %v1149, %v1225
      %vm1235 = vcmp.eq.s32.totalorder %v1150, %v1225
      %vm1236 = vcmp.eq.s32.totalorder %v1151, %v1225
      %vm1237 = vcmp.eq.s32.totalorder %v1152, %v1225
      %vm1238 = vcmp.eq.s32.totalorder %v1153, %v1225
      %vm1239 = vcmp.eq.s32.totalorder %v1154, %v1225
      %vm1240 = vcmp.eq.s32.totalorder %v1155, %v1225
      %vm1241 = vcmp.eq.s32.totalorder %v1156, %v1225
      %vm1242 = vcmp.eq.s32.totalorder %v1157, %v1225
      %vm1243 = vcmp.eq.s32.totalorder %v1158, %v1225
      %vm1244 = vcmp.eq.s32.totalorder %v1159, %v1225
      %vm1245 = vcmp.eq.s32.totalorder %v1160, %v1225
      %vm1246 = vcmp.eq.s32.totalorder %v1161, %v1225
      %vm1247 = vcmp.eq.s32.totalorder %v1162, %v1225
      %vm1248 = vcmp.eq.s32.totalorder %v1163, %v1225
      %vm1249 = vcmp.eq.s32.totalorder %v1164, %v1225
      %vm1250 = vcmp.eq.s32.totalorder %v1165, %v1225
      %vm1251 = vcmp.eq.s32.totalorder %v1166, %v1225
      %vm1252 = vcmp.eq.s32.totalorder %v1167, %v1225
      %vm1253 = vcmp.eq.s32.totalorder %v1168, %v1225
      %vm1254 = vcmp.eq.s32.totalorder %v1169, %v1225
      %vm1255 = vcmp.eq.s32.totalorder %v1170, %v1225
      %vm1256 = vcmp.eq.s32.totalorder %v1171, %v1225
      %vm1257 = vcmp.eq.s32.totalorder %v1172, %v1225
      %vm1258 = vcmp.eq.s32.totalorder %v1173, %v1225
      %vm1259 = vcmp.eq.s32.totalorder %v1174, %v1225
      %vm1260 = vcmp.eq.s32.totalorder %v1175, %v1225
      %vm1261 = vcmp.eq.s32.totalorder %v1176, %v1225
      %vm1262 = vcmp.eq.s32.totalorder %v1177, %v1225
      %vm1263 = vcmp.eq.s32.totalorder %v1178, %v1225
      %vm1264 = vcmp.eq.s32.totalorder %v1179, %v1225
      %vm1265 = vcmp.eq.s32.totalorder %v1180, %v1225
      %vm1266 = vcmp.eq.s32.totalorder %v1181, %v1225
      %vm1267 = vcmp.eq.s32.totalorder %v1182, %v1225
      %vm1268 = vcmp.eq.s32.totalorder %v1183, %v1225
      %vm1269 = vcmp.eq.s32.totalorder %v1184, %v1225
      %vm1270 = vcmp.eq.s32.totalorder %v1185, %v1225
      %vm1271 = vcmp.eq.s32.totalorder %v1186, %v1225
      %vm1272 = vcmp.eq.s32.totalorder %v1187, %v1225
      %vm1273 = vcmp.eq.s32.totalorder %v1188, %v1225
      %vm1274 = vcmp.eq.s32.totalorder %v1189, %v1225
      %vm1275 = vcmp.eq.s32.totalorder %v1190, %v1225
      %vm1276 = vcmp.eq.s32.totalorder %v1191, %v1225
      %vm1277 = vcmp.eq.s32.totalorder %v1192, %v1225
      %vm1278 = vcmp.eq.s32.totalorder %v1193, %v1225
      %vm1279 = vcmp.eq.s32.totalorder %v1194, %v1225
      %vm1280 = vcmp.eq.s32.totalorder %v1195, %v1225
      %vm1281 = vcmp.eq.s32.totalorder %v1196, %v1225
      %vm1282 = vcmp.eq.s32.totalorder %v1197, %v1225
      %vm1283 = vcmp.eq.s32.totalorder %v1198, %v1225
      %vm1284 = vcmp.eq.s32.totalorder %v1199, %v1225
      %vm1285 = vcmp.eq.s32.totalorder %v1200, %v1225
      %vm1286 = vcmp.eq.s32.totalorder %v1201, %v1225
      %vm1287 = vcmp.eq.s32.totalorder %v1202, %v1225
      %vm1288 = vcmp.eq.s32.totalorder %v1203, %v1225
      %vm1289 = vcmp.eq.s32.totalorder %v1204, %v1225
      %vm1290 = vcmp.eq.s32.totalorder %v1205, %v1225
      %vm1291 = vcmp.eq.s32.totalorder %v1206, %v1225
      %vm1292 = vcmp.eq.s32.totalorder %v1207, %v1225
      %vm1293 = vcmp.eq.s32.totalorder %v1208, %v1225
      %vm1294 = vcmp.eq.s32.totalorder %v1209, %v1225
      %vm1295 = vcmp.eq.s32.totalorder %v1210, %v1225
      %vm1296 = vcmp.eq.s32.totalorder %v1211, %v1225
      %vm1297 = vcmp.eq.s32.totalorder %v1212, %v1225
      %vm1298 = vcmp.eq.s32.totalorder %v1213, %v1225
      %vm1299 = vcmp.eq.s32.totalorder %v1214, %v1225
      %vm1300 = vcmp.eq.s32.totalorder %v1215, %v1225
      %vm1301 = vcmp.eq.s32.totalorder %v1216, %v1225
      %vm1302 = vcmp.eq.s32.totalorder %v1217, %v1225
      %vm1303 = vcmp.eq.s32.totalorder %v1218, %v1225
      %vm1304 = vcmp.eq.s32.totalorder %v1219, %v1225
      %vm1305 = vcmp.eq.s32.totalorder %v1220, %v1225
      %v1306 = vsel %vm1226, 1, 0
      %v1307 = vsel %vm1227, 1, 0
      %v1308 = vsel %vm1228, 1, 0
      %v1309 = vsel %vm1229, 1, 0
      %v1310 = vsel %vm1230, 1, 0
      %v1311 = vsel %vm1231, 1, 0
      %v1312 = vsel %vm1232, 1, 0
      %v1313 = vsel %vm1233, 1, 0
      %v1314 = vsel %vm1234, 1, 0
      %v1315 = vsel %vm1235, 1, 0
      %v1316 = vsel %vm1236, 1, 0
      %v1317 = vsel %vm1237, 1, 0
      %v1318 = vsel %vm1238, 1, 0
      %v1319 = vsel %vm1239, 1, 0
      %v1320 = vsel %vm1240, 1, 0
      %v1321 = vsel %vm1241, 1, 0
      %v1322 = vsel %vm1242, 1, 0
      %v1323 = vsel %vm1243, 1, 0
      %v1324 = vsel %vm1244, 1, 0
      %v1325 = vsel %vm1245, 1, 0
      %v1326 = vsel %vm1246, 1, 0
      %v1327 = vsel %vm1247, 1, 0
      %v1328 = vsel %vm1248, 1, 0
      %v1329 = vsel %vm1249, 1, 0
      %v1330 = vsel %vm1250, 1, 0
      %v1331 = vsel %vm1251, 1, 0
      %v1332 = vsel %vm1252, 1, 0
      %v1333 = vsel %vm1253, 1, 0
      %v1334 = vsel %vm1254, 1, 0
      %v1335 = vsel %vm1255, 1, 0
      %v1336 = vsel %vm1256, 1, 0
      %v1337 = vsel %vm1257, 1, 0
      %v1338 = vsel %vm1258, 1, 0
      %v1339 = vsel %vm1259, 1, 0
      %v1340 = vsel %vm1260, 1, 0
      %v1341 = vsel %vm1261, 1, 0
      %v1342 = vsel %vm1262, 1, 0
      %v1343 = vsel %vm1263, 1, 0
      %v1344 = vsel %vm1264, 1, 0
      %v1345 = vsel %vm1265, 1, 0
      %v1346 = vsel %vm1266, 1, 0
      %v1347 = vsel %vm1267, 1, 0
      %v1348 = vsel %vm1268, 1, 0
      %v1349 = vsel %vm1269, 1, 0
      %v1350 = vsel %vm1270, 1, 0
      %v1351 = vsel %vm1271, 1, 0
      %v1352 = vsel %vm1272, 1, 0
      %v1353 = vsel %vm1273, 1, 0
      %v1354 = vsel %vm1274, 1, 0
      %v1355 = vsel %vm1275, 1, 0
      %v1356 = vsel %vm1276, 1, 0
      %v1357 = vsel %vm1277, 1, 0
      %v1358 = vsel %vm1278, 1, 0
      %v1359 = vsel %vm1279, 1, 0
      %v1360 = vsel %vm1280, 1, 0
      %v1361 = vsel %vm1281, 1, 0
      %v1362 = vsel %vm1282, 1, 0
      %v1363 = vsel %vm1283, 1, 0
      %v1364 = vsel %vm1284, 1, 0
      %v1365 = vsel %vm1285, 1, 0
      %v1366 = vsel %vm1286, 1, 0
      %v1367 = vsel %vm1287, 1, 0
      %v1368 = vsel %vm1288, 1, 0
      %v1369 = vsel %vm1289, 1, 0
      %v1370 = vsel %vm1290, 1, 0
      %v1371 = vsel %vm1291, 1, 0
      %v1372 = vsel %vm1292, 1, 0
      %v1373 = vsel %vm1293, 1, 0
      %v1374 = vsel %vm1294, 1, 0
      %v1375 = vsel %vm1295, 1, 0
      %v1376 = vsel %vm1296, 1, 0
      %v1377 = vsel %vm1297, 1, 0
      %v1378 = vsel %vm1298, 1, 0
      %v1379 = vsel %vm1299, 1, 0
      %v1380 = vsel %vm1300, 1, 0
      %v1381 = vsel %vm1301, 1, 0
      %v1382 = vsel %vm1302, 1, 0
      %v1383 = vsel %vm1303, 1, 0
      %v1384 = vsel %vm1304, 1, 0
      %v1385 = vsel %vm1305, 1, 0
      %v1386 = vcvt.s32.f32 %v1306
      %v1387 = vcvt.s32.f32 %v1307
      %v1388 = vcvt.s32.f32 %v1308
      %v1389 = vcvt.s32.f32 %v1309
      %v1390 = vcvt.s32.f32 %v1310
      %v1391 = vcvt.s32.f32 %v1311
      %v1392 = vcvt.s32.f32 %v1312
      %v1393 = vcvt.s32.f32 %v1313
      %v1394 = vcvt.s32.f32 %v1314
      %v1395 = vcvt.s32.f32 %v1315
      %v1396 = vcvt.s32.f32 %v1316
      %v1397 = vcvt.s32.f32 %v1317
      %v1398 = vcvt.s32.f32 %v1318
      %v1399 = vcvt.s32.f32 %v1319
      %v1400 = vcvt.s32.f32 %v1320
      %v1401 = vcvt.s32.f32 %v1321
      %v1402 = vcvt.s32.f32 %v1322
      %v1403 = vcvt.s32.f32 %v1323
      %v1404 = vcvt.s32.f32 %v1324
      %v1405 = vcvt.s32.f32 %v1325
      %v1406 = vcvt.s32.f32 %v1326
      %v1407 = vcvt.s32.f32 %v1327
      %v1408 = vcvt.s32.f32 %v1328
      %v1409 = vcvt.s32.f32 %v1329
      %v1410 = vcvt.s32.f32 %v1330
      %v1411 = vcvt.s32.f32 %v1331
      %v1412 = vcvt.s32.f32 %v1332
      %v1413 = vcvt.s32.f32 %v1333
      %v1414 = vcvt.s32.f32 %v1334
      %v1415 = vcvt.s32.f32 %v1335
      %v1416 = vcvt.s32.f32 %v1336
      %v1417 = vcvt.s32.f32 %v1337
      %v1418 = vcvt.s32.f32 %v1338
      %v1419 = vcvt.s32.f32 %v1339
      %v1420 = vcvt.s32.f32 %v1340
      %v1421 = vcvt.s32.f32 %v1341
      %v1422 = vcvt.s32.f32 %v1342
      %v1423 = vcvt.s32.f32 %v1343
      %v1424 = vcvt.s32.f32 %v1344
      %v1425 = vcvt.s32.f32 %v1345
      %v1426 = vcvt.s32.f32 %v1346
      %v1427 = vcvt.s32.f32 %v1347
      %v1428 = vcvt.s32.f32 %v1348
      %v1429 = vcvt.s32.f32 %v1349
      %v1430 = vcvt.s32.f32 %v1350
      %v1431 = vcvt.s32.f32 %v1351
      %v1432 = vcvt.s32.f32 %v1352
      %v1433 = vcvt.s32.f32 %v1353
      %v1434 = vcvt.s32.f32 %v1354
      %v1435 = vcvt.s32.f32 %v1355
      %v1436 = vcvt.s32.f32 %v1356
      %v1437 = vcvt.s32.f32 %v1357
      %v1438 = vcvt.s32.f32 %v1358
      %v1439 = vcvt.s32.f32 %v1359
      %v1440 = vcvt.s32.f32 %v1360
      %v1441 = vcvt.s32.f32 %v1361
      %v1442 = vcvt.s32.f32 %v1362
      %v1443 = vcvt.s32.f32 %v1363
      %v1444 = vcvt.s32.f32 %v1364
      %v1445 = vcvt.s32.f32 %v1365
      %v1446 = vcvt.s32.f32 %v1366
      %v1447 = vcvt.s32.f32 %v1367
      %v1448 = vcvt.s32.f32 %v1368
      %v1449 = vcvt.s32.f32 %v1369
      %v1450 = vcvt.s32.f32 %v1370
      %v1451 = vcvt.s32.f32 %v1371
      %v1452 = vcvt.s32.f32 %v1372
      %v1453 = vcvt.s32.f32 %v1373
      %v1454 = vcvt.s32.f32 %v1374
      %v1455 = vcvt.s32.f32 %v1375
      %v1456 = vcvt.s32.f32 %v1376
      %v1457 = vcvt.s32.f32 %v1377
      %v1458 = vcvt.s32.f32 %v1378
      %v1459 = vcvt.s32.f32 %v1379
      %v1460 = vcvt.s32.f32 %v1380
      %v1461 = vcvt.s32.f32 %v1381
      %v1462 = vcvt.s32.f32 %v1382
      %v1463 = vcvt.s32.f32 %v1383
      %v1464 = vcvt.s32.f32 %v1384
      %v1465 = vcvt.s32.f32 %v1385
      %1466 = vmatprep.subr.mxu0 0.0
      %1467 = vmatpush1.msra.mxu0 %v1137
      %1468 = vmatprep.subr.mxu0 0.0
      %1469 = vmatpush1.msra.mxu0 %v1132
      %1470 = vmatprep.subr.mxu0 0.0
      %1471 = vmatpush1.msra.mxu0 %v1127
      %1472 = vmatprep.subr.mxu0 0.0
      %1473 = vmatpush1.msra.mxu0 %v1122
      %1474 = vmatprep.subr.mxu0 0.0
      %1475 = vmatpush1.msra.mxu0 %v1117
      %1476 = vmatprep.subr.mxu0 0.0
      %1477 = vmatpush1.msra.mxu0 %v1112
      %1478 = vmatprep.subr.mxu0 0.0
      %1479 = vmatpush1.msra.mxu0 %v1107
      %1480 = vmatprep.subr.mxu0 0.0
      %1481 = vmatpush1.msra.mxu0 %v1102
      %1482 = vmatprep.subr.mxu0 0.0
      %1483 = vmatpush1.msra.mxu0 %v1097
      %1484 = vmatprep.subr.mxu0 0.0
      %1485 = vmatpush1.msra.mxu0 %v1092
      %1486 = vmatprep.subr.mxu0 0.0
      %1487 = vmatpush1.msra.mxu0 %v1087
      %1488 = vmatprep.subr.mxu0 0.0
      %1489 = vmatpush1.msra.mxu0 %v1082
      %1490 = vmatprep.subr.mxu0 0.0
      %1491 = vmatpush1.msra.mxu0 %v1077
      %1492 = vmatprep.subr.mxu0 0.0
      %1493 = vmatpush1.msra.mxu0 %v1072
      %1494 = vmatprep.subr.mxu0 0.0
      %1495 = vmatpush1.msra.mxu0 %v1067
      %1496 = vmatprep.subr.mxu0 0.0
      %1497 = vmatpush1.msra.mxu0 %v1062
      %1498 = vmatprep.subr.mxu0 0.0
      %1499 = vmatpush2.msra.mxu0 0.0
      %1500 = vmatprep.subr.mxu0 0.0
      %1501 = vmatpush2.msra.mxu0 0.0
      %1502 = vmatprep.subr.mxu0 0.0
      %1503 = vmatpush2.msra.mxu0 0.0
      %1504 = vmatprep.subr.mxu0 0.0
      %1505 = vmatpush2.msra.mxu0 0.0
      %1506 = vmatprep.subr.mxu0 0.0
      %1507 = vmatpush2.msra.mxu0 0.0
      %1508 = vmatprep.subr.mxu0 0.0
      %1509 = vmatpush2.msra.mxu0 0.0
      %1510 = vmatprep.subr.mxu0 0.0
      %1511 = vmatpush2.msra.mxu0 0.0
      %1512 = vmatprep.subr.mxu0 0.0
      %1513 = vmatpush2.msra.mxu0 0.0
      %1514 = vmatprep.subr.mxu0 0.0
      %1515 = vmatpush2.msra.mxu0 0.0
      %1516 = vmatprep.subr.mxu0 0.0
      %1517 = vmatpush2.msra.mxu0 0.0
      %1518 = vmatprep.subr.mxu0 0.0
      %1519 = vmatpush2.msra.mxu0 0.0
      %1520 = vmatprep.subr.mxu0 0.0
      %1521 = vmatpush2.msra.mxu0 0.0
      %1522 = vmatprep.subr.mxu0 0.0
      %1523 = vmatpush2.msra.mxu0 0.0
      %1524 = vmatprep.subr.mxu0 0.0
      %1525 = vmatpush2.msra.mxu0 0.0
      %1526 = vmatprep.subr.mxu0 0.0
      %1527 = vmatpush2.msra.mxu0 0.0
      %1528 = vmatprep.subr.mxu0 0.0
      %1529 = vmatpush2.msra.mxu0 0.0
      %1530 = vmatprep.mubr.f32.mxu0 0.0
      %1531 = vmatmul.mubr.f32.gmra.mxu0 %v1386
      %v1532 = vpop.f32.mrf.mxu0
      %v1533 = vadd.f32 0.0, %v1532
      %v1534 = vpop.f32.mrf.mxu0
      %1535 = vmatprep.mubr.f32.mxu0 0.0
      %1536 = vmatmul.mubr.f32.gmra.mxu0 %v1387
      %v1537 = vpop.f32.mrf.mxu0
      %v1538 = vadd.f32 0.0, %v1537
      %v1539 = vpop.f32.mrf.mxu0
      %1540 = vmatprep.mubr.f32.mxu0 0.0
      %1541 = vmatmul.mubr.f32.gmra.mxu0 %v1388
      %v1542 = vpop.f32.mrf.mxu0
      %v1543 = vadd.f32 0.0, %v1542
      %v1544 = vpop.f32.mrf.mxu0
      %1545 = vmatprep.mubr.f32.mxu0 0.0
      %1546 = vmatmul.mubr.f32.gmra.mxu0 %v1389
      %v1547 = vpop.f32.mrf.mxu0
      %v1548 = vadd.f32 0.0, %v1547
      %v1549 = vpop.f32.mrf.mxu0
      %1550 = vmatprep.mubr.f32.mxu0 0.0
      %1551 = vmatmul.mubr.f32.gmra.mxu0 %v1390
      %v1552 = vpop.f32.mrf.mxu0
      %v1553 = vadd.f32 0.0, %v1552
      %v1554 = vpop.f32.mrf.mxu0
      %1555 = vmatprep.mubr.f32.mxu0 0.0
      %1556 = vmatmul.mubr.f32.gmra.mxu0 %v1391
      %v1557 = vpop.f32.mrf.mxu0
      %v1558 = vadd.f32 0.0, %v1557
      %v1559 = vpop.f32.mrf.mxu0
      %1560 = vmatprep.mubr.f32.mxu0 0.0
      %1561 = vmatmul.mubr.f32.gmra.mxu0 %v1392
      %v1562 = vpop.f32.mrf.mxu0
      %v1563 = vadd.f32 0.0, %v1562
      %v1564 = vpop.f32.mrf.mxu0
      %1565 = vmatprep.mubr.f32.mxu0 0.0
      %1566 = vmatmul.mubr.f32.gmra.mxu0 %v1393
      %v1567 = vpop.f32.mrf.mxu0
      %v1568 = vadd.f32 0.0, %v1567
      %v1569 = vpop.f32.mrf.mxu0
      %1570 = vmatprep.mubr.f32.mxu0 0.0
      %1571 = vmatmul.mubr.f32.gmra.mxu0 %v1394
      %v1572 = vpop.f32.mrf.mxu0
      %v1573 = vadd.f32 0.0, %v1572
      %v1574 = vpop.f32.mrf.mxu0
      %1575 = vmatprep.mubr.f32.mxu0 0.0
      %1576 = vmatmul.mubr.f32.gmra.mxu0 %v1395
      %v1577 = vpop.f32.mrf.mxu0
      %v1578 = vadd.f32 0.0, %v1577
      %v1579 = vpop.f32.mrf.mxu0
      %1580 = vmatprep.mubr.f32.mxu0 0.0
      %1581 = vmatmul.mubr.f32.gmra.mxu0 %v1396
      %v1582 = vpop.f32.mrf.mxu0
      %v1583 = vadd.f32 0.0, %v1582
      %v1584 = vpop.f32.mrf.mxu0
      %1585 = vmatprep.mubr.f32.mxu0 0.0
      %1586 = vmatmul.mubr.f32.gmra.mxu0 %v1397
      %v1587 = vpop.f32.mrf.mxu0
      %v1588 = vadd.f32 0.0, %v1587
      %v1589 = vpop.f32.mrf.mxu0
      %1590 = vmatprep.mubr.f32.mxu0 0.0
      %1591 = vmatmul.mubr.f32.gmra.mxu0 %v1398
      %v1592 = vpop.f32.mrf.mxu0
      %v1593 = vadd.f32 0.0, %v1592
      %v1594 = vpop.f32.mrf.mxu0
      %1595 = vmatprep.mubr.f32.mxu0 0.0
      %1596 = vmatmul.mubr.f32.gmra.mxu0 %v1399
      %v1597 = vpop.f32.mrf.mxu0
      %v1598 = vadd.f32 0.0, %v1597
      %v1599 = vpop.f32.mrf.mxu0
      %1600 = vmatprep.mubr.f32.mxu0 0.0
      %1601 = vmatmul.mubr.f32.gmra.mxu0 %v1400
      %v1602 = vpop.f32.mrf.mxu0
      %v1603 = vadd.f32 0.0, %v1602
      %v1604 = vpop.f32.mrf.mxu0
      %1605 = vmatprep.mubr.f32.mxu0 0.0
      %1606 = vmatmul.mubr.f32.gmra.mxu0 %v1401
      %v1607 = vpop.f32.mrf.mxu0
      %v1608 = vadd.f32 0.0, %v1607
      %v1609 = vpop.f32.mrf.mxu0
      %1610 = vmatprep.mubr.f32.mxu0 0.0
      %1611 = vmatmul.mubr.f32.gmra.mxu0 %v1402
      %v1612 = vpop.f32.mrf.mxu0
      %v1613 = vadd.f32 0.0, %v1612
      %v1614 = vpop.f32.mrf.mxu0
      %1615 = vmatprep.mubr.f32.mxu0 0.0
      %1616 = vmatmul.mubr.f32.gmra.mxu0 %v1403
      %v1617 = vpop.f32.mrf.mxu0
      %v1618 = vadd.f32 0.0, %v1617
      %v1619 = vpop.f32.mrf.mxu0
      %1620 = vmatprep.mubr.f32.mxu0 0.0
      %1621 = vmatmul.mubr.f32.gmra.mxu0 %v1404
      %v1622 = vpop.f32.mrf.mxu0
      %v1623 = vadd.f32 0.0, %v1622
      %v1624 = vpop.f32.mrf.mxu0
      %1625 = vmatprep.mubr.f32.mxu0 0.0
      %1626 = vmatmul.mubr.f32.gmra.mxu0 %v1405
      %v1627 = vpop.f32.mrf.mxu0
      %v1628 = vadd.f32 0.0, %v1627
      %v1629 = vpop.f32.mrf.mxu0
      %1630 = vmatprep.mubr.f32.mxu0 0.0
      %1631 = vmatmul.mubr.f32.gmra.mxu0 %v1406
      %v1632 = vpop.f32.mrf.mxu0
      %v1633 = vadd.f32 0.0, %v1632
      %v1634 = vpop.f32.mrf.mxu0
      %1635 = vmatprep.mubr.f32.mxu0 0.0
      %1636 = vmatmul.mubr.f32.gmra.mxu0 %v1407
      %v1637 = vpop.f32.mrf.mxu0
      %v1638 = vadd.f32 0.0, %v1637
      %v1639 = vpop.f32.mrf.mxu0
      %1640 = vmatprep.mubr.f32.mxu0 0.0
      %1641 = vmatmul.mubr.f32.gmra.mxu0 %v1408
      %v1642 = vpop.f32.mrf.mxu0
      %v1643 = vadd.f32 0.0, %v1642
      %v1644 = vpop.f32.mrf.mxu0
      %1645 = vmatprep.mubr.f32.mxu0 0.0
      %1646 = vmatmul.mubr.f32.gmra.mxu0 %v1409
      %v1647 = vpop.f32.mrf.mxu0
      %v1648 = vadd.f32 0.0, %v1647
      %v1649 = vpop.f32.mrf.mxu0
      %1650 = vmatprep.mubr.f32.mxu0 0.0
      %1651 = vmatmul.mubr.f32.gmra.mxu0 %v1410
      %v1652 = vpop.f32.mrf.mxu0
      %v1653 = vadd.f32 0.0, %v1652
      %v1654 = vpop.f32.mrf.mxu0
      %1655 = vmatprep.mubr.f32.mxu0 0.0
      %1656 = vmatmul.mubr.f32.gmra.mxu0 %v1411
      %v1657 = vpop.f32.mrf.mxu0
      %v1658 = vadd.f32 0.0, %v1657
      %v1659 = vpop.f32.mrf.mxu0
      %1660 = vmatprep.mubr.f32.mxu0 0.0
      %1661 = vmatmul.mubr.f32.gmra.mxu0 %v1412
      %v1662 = vpop.f32.mrf.mxu0
      %v1663 = vadd.f32 0.0, %v1662
      %v1664 = vpop.f32.mrf.mxu0
      %1665 = vmatprep.mubr.f32.mxu0 0.0
      %1666 = vmatmul.mubr.f32.gmra.mxu0 %v1413
      %v1667 = vpop.f32.mrf.mxu0
      %v1668 = vadd.f32 0.0, %v1667
      %v1669 = vpop.f32.mrf.mxu0
      %1670 = vmatprep.mubr.f32.mxu0 0.0
      %1671 = vmatmul.mubr.f32.gmra.mxu0 %v1414
      %v1672 = vpop.f32.mrf.mxu0
      %v1673 = vadd.f32 0.0, %v1672
      %v1674 = vpop.f32.mrf.mxu0
      %1675 = vmatprep.mubr.f32.mxu0 0.0
      %1676 = vmatmul.mubr.f32.gmra.mxu0 %v1415
      %v1677 = vpop.f32.mrf.mxu0
      %v1678 = vadd.f32 0.0, %v1677
      %v1679 = vpop.f32.mrf.mxu0
      %1680 = vmatprep.mubr.f32.mxu0 0.0
      %1681 = vmatmul.mubr.f32.gmra.mxu0 %v1416
      %v1682 = vpop.f32.mrf.mxu0
      %v1683 = vadd.f32 0.0, %v1682
      %v1684 = vpop.f32.mrf.mxu0
      %1685 = vmatprep.mubr.f32.mxu0 0.0
      %1686 = vmatmul.mubr.f32.gmra.mxu0 %v1417
      %v1687 = vpop.f32.mrf.mxu0
      %v1688 = vadd.f32 0.0, %v1687
      %v1689 = vpop.f32.mrf.mxu0
      %1690 = vmatprep.mubr.f32.mxu0 0.0
      %1691 = vmatmul.mubr.f32.gmra.mxu0 %v1418
      %v1692 = vpop.f32.mrf.mxu0
      %v1693 = vadd.f32 0.0, %v1692
      %v1694 = vpop.f32.mrf.mxu0
      %1695 = vmatprep.mubr.f32.mxu0 0.0
      %1696 = vmatmul.mubr.f32.gmra.mxu0 %v1419
      %v1697 = vpop.f32.mrf.mxu0
      %v1698 = vadd.f32 0.0, %v1697
      %v1699 = vpop.f32.mrf.mxu0
      %1700 = vmatprep.mubr.f32.mxu0 0.0
      %1701 = vmatmul.mubr.f32.gmra.mxu0 %v1420
      %v1702 = vpop.f32.mrf.mxu0
      %v1703 = vadd.f32 0.0, %v1702
      %v1704 = vpop.f32.mrf.mxu0
      %1705 = vmatprep.mubr.f32.mxu0 0.0
      %1706 = vmatmul.mubr.f32.gmra.mxu0 %v1421
      %v1707 = vpop.f32.mrf.mxu0
      %v1708 = vadd.f32 0.0, %v1707
      %v1709 = vpop.f32.mrf.mxu0
      %1710 = vmatprep.mubr.f32.mxu0 0.0
      %1711 = vmatmul.mubr.f32.gmra.mxu0 %v1422
      %v1712 = vpop.f32.mrf.mxu0
      %v1713 = vadd.f32 0.0, %v1712
      %v1714 = vpop.f32.mrf.mxu0
      %1715 = vmatprep.mubr.f32.mxu0 0.0
      %1716 = vmatmul.mubr.f32.gmra.mxu0 %v1423
      %v1717 = vpop.f32.mrf.mxu0
      %v1718 = vadd.f32 0.0, %v1717
      %v1719 = vpop.f32.mrf.mxu0
      %1720 = vmatprep.mubr.f32.mxu0 0.0
      %1721 = vmatmul.mubr.f32.gmra.mxu0 %v1424
      %v1722 = vpop.f32.mrf.mxu0
      %v1723 = vadd.f32 0.0, %v1722
      %v1724 = vpop.f32.mrf.mxu0
      %1725 = vmatprep.mubr.f32.mxu0 0.0
      %1726 = vmatmul.mubr.f32.gmra.mxu0 %v1425
      %v1727 = vpop.f32.mrf.mxu0
      %v1728 = vadd.f32 0.0, %v1727
      %v1729 = vpop.f32.mrf.mxu0
      %1730 = vmatprep.mubr.f32.mxu0 0.0
      %1731 = vmatmul.mubr.f32.gmra.mxu0 %v1426
      %v1732 = vpop.f32.mrf.mxu0
      %v1733 = vadd.f32 0.0, %v1732
      %v1734 = vpop.f32.mrf.mxu0
      %1735 = vmatprep.mubr.f32.mxu0 0.0
      %1736 = vmatmul.mubr.f32.gmra.mxu0 %v1427
      %v1737 = vpop.f32.mrf.mxu0
      %v1738 = vadd.f32 0.0, %v1737
      %v1739 = vpop.f32.mrf.mxu0
      %1740 = vmatprep.mubr.f32.mxu0 0.0
      %1741 = vmatmul.mubr.f32.gmra.mxu0 %v1428
      %v1742 = vpop.f32.mrf.mxu0
      %v1743 = vadd.f32 0.0, %v1742
      %v1744 = vpop.f32.mrf.mxu0
      %1745 = vmatprep.mubr.f32.mxu0 0.0
      %1746 = vmatmul.mubr.f32.gmra.mxu0 %v1429
      %v1747 = vpop.f32.mrf.mxu0
      %v1748 = vadd.f32 0.0, %v1747
      %v1749 = vpop.f32.mrf.mxu0
      %1750 = vmatprep.mubr.f32.mxu0 0.0
      %1751 = vmatmul.mubr.f32.gmra.mxu0 %v1430
      %v1752 = vpop.f32.mrf.mxu0
      %v1753 = vadd.f32 0.0, %v1752
      %v1754 = vpop.f32.mrf.mxu0
      %1755 = vmatprep.mubr.f32.mxu0 0.0
      %1756 = vmatmul.mubr.f32.gmra.mxu0 %v1431
      %v1757 = vpop.f32.mrf.mxu0
      %v1758 = vadd.f32 0.0, %v1757
      %v1759 = vpop.f32.mrf.mxu0
      %1760 = vmatprep.mubr.f32.mxu0 0.0
      %1761 = vmatmul.mubr.f32.gmra.mxu0 %v1432
      %v1762 = vpop.f32.mrf.mxu0
      %v1763 = vadd.f32 0.0, %v1762
      %v1764 = vpop.f32.mrf.mxu0
      %1765 = vmatprep.mubr.f32.mxu0 0.0
      %1766 = vmatmul.mubr.f32.gmra.mxu0 %v1433
      %v1767 = vpop.f32.mrf.mxu0
      %v1768 = vadd.f32 0.0, %v1767
      %v1769 = vpop.f32.mrf.mxu0
      %1770 = vmatprep.mubr.f32.mxu0 0.0
      %1771 = vmatmul.mubr.f32.gmra.mxu0 %v1434
      %v1772 = vpop.f32.mrf.mxu0
      %v1773 = vadd.f32 0.0, %v1772
      %v1774 = vpop.f32.mrf.mxu0
      %1775 = vmatprep.mubr.f32.mxu0 0.0
      %1776 = vmatmul.mubr.f32.gmra.mxu0 %v1435
      %v1777 = vpop.f32.mrf.mxu0
      %v1778 = vadd.f32 0.0, %v1777
      %v1779 = vpop.f32.mrf.mxu0
      %1780 = vmatprep.mubr.f32.mxu0 0.0
      %1781 = vmatmul.mubr.f32.gmra.mxu0 %v1436
      %v1782 = vpop.f32.mrf.mxu0
      %v1783 = vadd.f32 0.0, %v1782
      %v1784 = vpop.f32.mrf.mxu0
      %1785 = vmatprep.mubr.f32.mxu0 0.0
      %1786 = vmatmul.mubr.f32.gmra.mxu0 %v1437
      %v1787 = vpop.f32.mrf.mxu0
      %v1788 = vadd.f32 0.0, %v1787
      %v1789 = vpop.f32.mrf.mxu0
      %1790 = vmatprep.mubr.f32.mxu0 0.0
      %1791 = vmatmul.mubr.f32.gmra.mxu0 %v1438
      %v1792 = vpop.f32.mrf.mxu0
      %v1793 = vadd.f32 0.0, %v1792
      %v1794 = vpop.f32.mrf.mxu0
      %1795 = vmatprep.mubr.f32.mxu0 0.0
      %1796 = vmatmul.mubr.f32.gmra.mxu0 %v1439
      %v1797 = vpop.f32.mrf.mxu0
      %v1798 = vadd.f32 0.0, %v1797
      %v1799 = vpop.f32.mrf.mxu0
      %1800 = vmatprep.mubr.f32.mxu0 0.0
      %1801 = vmatmul.mubr.f32.gmra.mxu0 %v1440
      %v1802 = vpop.f32.mrf.mxu0
      %v1803 = vadd.f32 0.0, %v1802
      %v1804 = vpop.f32.mrf.mxu0
      %1805 = vmatprep.mubr.f32.mxu0 0.0
      %1806 = vmatmul.mubr.f32.gmra.mxu0 %v1441
      %v1807 = vpop.f32.mrf.mxu0
      %v1808 = vadd.f32 0.0, %v1807
      %v1809 = vpop.f32.mrf.mxu0
      %1810 = vmatprep.mubr.f32.mxu0 0.0
      %1811 = vmatmul.mubr.f32.gmra.mxu0 %v1442
      %v1812 = vpop.f32.mrf.mxu0
      %v1813 = vadd.f32 0.0, %v1812
      %v1814 = vpop.f32.mrf.mxu0
      %1815 = vmatprep.mubr.f32.mxu0 0.0
      %1816 = vmatmul.mubr.f32.gmra.mxu0 %v1443
      %v1817 = vpop.f32.mrf.mxu0
      %v1818 = vadd.f32 0.0, %v1817
      %v1819 = vpop.f32.mrf.mxu0
      %1820 = vmatprep.mubr.f32.mxu0 0.0
      %1821 = vmatmul.mubr.f32.gmra.mxu0 %v1444
      %v1822 = vpop.f32.mrf.mxu0
      %v1823 = vadd.f32 0.0, %v1822
      %v1824 = vpop.f32.mrf.mxu0
      %1825 = vmatprep.mubr.f32.mxu0 0.0
      %1826 = vmatmul.mubr.f32.gmra.mxu0 %v1445
      %v1827 = vpop.f32.mrf.mxu0
      %v1828 = vadd.f32 0.0, %v1827
      %v1829 = vpop.f32.mrf.mxu0
      %1830 = vmatprep.mubr.f32.mxu0 0.0
      %1831 = vmatmul.mubr.f32.gmra.mxu0 %v1446
      %v1832 = vpop.f32.mrf.mxu0
      %v1833 = vadd.f32 0.0, %v1832
      %v1834 = vpop.f32.mrf.mxu0
      %1835 = vmatprep.mubr.f32.mxu0 0.0
      %1836 = vmatmul.mubr.f32.gmra.mxu0 %v1447
      %v1837 = vpop.f32.mrf.mxu0
      %v1838 = vadd.f32 0.0, %v1837
      %v1839 = vpop.f32.mrf.mxu0
      %1840 = vmatprep.mubr.f32.mxu0 0.0
      %1841 = vmatmul.mubr.f32.gmra.mxu0 %v1448
      %v1842 = vpop.f32.mrf.mxu0
      %v1843 = vadd.f32 0.0, %v1842
      %v1844 = vpop.f32.mrf.mxu0
      %1845 = vmatprep.mubr.f32.mxu0 0.0
      %1846 = vmatmul.mubr.f32.gmra.mxu0 %v1449
      %v1847 = vpop.f32.mrf.mxu0
      %v1848 = vadd.f32 0.0, %v1847
      %v1849 = vpop.f32.mrf.mxu0
      %1850 = vmatprep.mubr.f32.mxu0 0.0
      %1851 = vmatmul.mubr.f32.gmra.mxu0 %v1450
      %v1852 = vpop.f32.mrf.mxu0
      %v1853 = vadd.f32 0.0, %v1852
      %v1854 = vpop.f32.mrf.mxu0
      %1855 = vmatprep.mubr.f32.mxu0 0.0
      %1856 = vmatmul.mubr.f32.gmra.mxu0 %v1451
      %v1857 = vpop.f32.mrf.mxu0
      %v1858 = vadd.f32 0.0, %v1857
      %v1859 = vpop.f32.mrf.mxu0
      %1860 = vmatprep.mubr.f32.mxu0 0.0
      %1861 = vmatmul.mubr.f32.gmra.mxu0 %v1452
      %v1862 = vpop.f32.mrf.mxu0
      %v1863 = vadd.f32 0.0, %v1862
      %v1864 = vpop.f32.mrf.mxu0
      %1865 = vmatprep.mubr.f32.mxu0 0.0
      %1866 = vmatmul.mubr.f32.gmra.mxu0 %v1453
      %v1867 = vpop.f32.mrf.mxu0
      %v1868 = vadd.f32 0.0, %v1867
      %v1869 = vpop.f32.mrf.mxu0
      %1870 = vmatprep.mubr.f32.mxu0 0.0
      %1871 = vmatmul.mubr.f32.gmra.mxu0 %v1454
      %v1872 = vpop.f32.mrf.mxu0
      %v1873 = vadd.f32 0.0, %v1872
      %v1874 = vpop.f32.mrf.mxu0
      %1875 = vmatprep.mubr.f32.mxu0 0.0
      %1876 = vmatmul.mubr.f32.gmra.mxu0 %v1455
      %v1877 = vpop.f32.mrf.mxu0
      %v1878 = vadd.f32 0.0, %v1877
      %v1879 = vpop.f32.mrf.mxu0
      %1880 = vmatprep.mubr.f32.mxu0 0.0
      %1881 = vmatmul.mubr.f32.gmra.mxu0 %v1456
      %v1882 = vpop.f32.mrf.mxu0
      %v1883 = vadd.f32 0.0, %v1882
      %v1884 = vpop.f32.mrf.mxu0
      %1885 = vmatprep.mubr.f32.mxu0 0.0
      %1886 = vmatmul.mubr.f32.gmra.mxu0 %v1457
      %v1887 = vpop.f32.mrf.mxu0
      %v1888 = vadd.f32 0.0, %v1887
      %v1889 = vpop.f32.mrf.mxu0
      %1890 = vmatprep.mubr.f32.mxu0 0.0
      %1891 = vmatmul.mubr.f32.gmra.mxu0 %v1458
      %v1892 = vpop.f32.mrf.mxu0
      %v1893 = vadd.f32 0.0, %v1892
      %v1894 = vpop.f32.mrf.mxu0
      %1895 = vmatprep.mubr.f32.mxu0 0.0
      %1896 = vmatmul.mubr.f32.gmra.mxu0 %v1459
      %v1897 = vpop.f32.mrf.mxu0
      %v1898 = vadd.f32 0.0, %v1897
      %v1899 = vpop.f32.mrf.mxu0
      %1900 = vmatprep.mubr.f32.mxu0 0.0
      %1901 = vmatmul.mubr.f32.gmra.mxu0 %v1460
      %v1902 = vpop.f32.mrf.mxu0
      %v1903 = vadd.f32 0.0, %v1902
      %v1904 = vpop.f32.mrf.mxu0
      %1905 = vmatprep.mubr.f32.mxu0 0.0
      %1906 = vmatmul.mubr.f32.gmra.mxu0 %v1461
      %v1907 = vpop.f32.mrf.mxu0
      %v1908 = vadd.f32 0.0, %v1907
      %v1909 = vpop.f32.mrf.mxu0
      %1910 = vmatprep.mubr.f32.mxu0 0.0
      %1911 = vmatmul.mubr.f32.gmra.mxu0 %v1462
      %v1912 = vpop.f32.mrf.mxu0
      %v1913 = vadd.f32 0.0, %v1912
      %v1914 = vpop.f32.mrf.mxu0
      %1915 = vmatprep.mubr.f32.mxu0 0.0
      %1916 = vmatmul.mubr.f32.gmra.mxu0 %v1463
      %v1917 = vpop.f32.mrf.mxu0
      %v1918 = vadd.f32 0.0, %v1917
      %v1919 = vpop.f32.mrf.mxu0
      %1920 = vmatprep.mubr.f32.mxu0 0.0
      %1921 = vmatmul.mubr.f32.gmra.mxu0 %v1464
      %v1922 = vpop.f32.mrf.mxu0
      %v1923 = vadd.f32 0.0, %v1922
      %v1924 = vpop.f32.mrf.mxu0
      %1925 = vmatprep.mubr.f32.mxu0 0.0
      %1926 = vmatmul.mubr.f32.gmra.mxu0 %v1465
      %v1927 = vpop.f32.mrf.mxu0
      %v1928 = vadd.f32 0.0, %v1927
      %v1929 = vpop.f32.mrf.mxu0
      %1930 = vdwg.mxu0
      %v1931 = vld [vmem:[%s288] sm:$0xff]
      %v1932 = vld [vmem:[%s288 + $0x8] sm:$0xff]
      %v1933 = vld [vmem:[%s288 + $0x10] sm:$0xff]
      %v1934 = vld [vmem:[%s288 + $0x18] sm:$0xff]
      %v1935 = vld [vmem:[%s288 + $0x20] sm:$0xff]
      %v1936 = vld [vmem:[%s288 + $0x28] sm:$0xff]
      %v1937 = vld [vmem:[%s288 + $0x30] sm:$0xff]
      %v1938 = vld [vmem:[%s288 + $0x38] sm:$0xff]
      %v1939 = vld [vmem:[%s288 + $0x40] sm:$0xff]
      %v1940 = vld [vmem:[%s288 + $0x48] sm:$0xff]
      %v1941 = vld [vmem:[%s288 + $0x50] sm:$0xff]
      %v1942 = vld [vmem:[%s288 + $0x58] sm:$0xff]
      %v1943 = vld [vmem:[%s288 + $0x60] sm:$0xff]
      %v1944 = vld [vmem:[%s288 + $0x68] sm:$0xff]
      %v1945 = vld [vmem:[%s288 + $0x70] sm:$0xff]
      %v1946 = vld [vmem:[%s288 + $0x78] sm:$0xff]
      %v1947 = vld [vmem:[%s288 + $0x80] sm:$0xff]
      %v1948 = vld [vmem:[%s288 + $0x88] sm:$0xff]
      %v1949 = vld [vmem:[%s288 + $0x90] sm:$0xff]
      %v1950 = vld [vmem:[%s288 + $0x98] sm:$0xff]
      %v1951 = vld [vmem:[%s288 + $0xa0] sm:$0xff]
      %v1952 = vld [vmem:[%s288 + $0xa8] sm:$0xff]
      %v1953 = vld [vmem:[%s288 + $0xb0] sm:$0xff]
      %v1954 = vld [vmem:[%s288 + $0xb8] sm:$0xff]
      %v1955 = vld [vmem:[%s288 + $0xc0] sm:$0xff]
      %v1956 = vld [vmem:[%s288 + $0xc8] sm:$0xff]
      %v1957 = vld [vmem:[%s288 + $0xd0] sm:$0xff]
      %v1958 = vld [vmem:[%s288 + $0xd8] sm:$0xff]
      %v1959 = vld [vmem:[%s288 + $0xe0] sm:$0xff]
      %v1960 = vld [vmem:[%s288 + $0xe8] sm:$0xff]
      %v1961 = vld [vmem:[%s288 + $0xf0] sm:$0xff]
      %v1962 = vld [vmem:[%s288 + $0xf8] sm:$0xff]
      %v1963 = vld [vmem:[%s288 + $0x100] sm:$0xff]
      %v1964 = vld [vmem:[%s288 + $0x108] sm:$0xff]
      %v1965 = vld [vmem:[%s288 + $0x110] sm:$0xff]
      %v1966 = vld [vmem:[%s288 + $0x118] sm:$0xff]
      %v1967 = vld [vmem:[%s288 + $0x120] sm:$0xff]
      %v1968 = vld [vmem:[%s288 + $0x128] sm:$0xff]
      %v1969 = vld [vmem:[%s288 + $0x130] sm:$0xff]
      %v1970 = vld [vmem:[%s288 + $0x138] sm:$0xff]
      %v1971 = vld [vmem:[%s288 + $0x140] sm:$0xff]
      %v1972 = vld [vmem:[%s288 + $0x148] sm:$0xff]
      %v1973 = vld [vmem:[%s288 + $0x150] sm:$0xff]
      %v1974 = vld [vmem:[%s288 + $0x158] sm:$0xff]
      %v1975 = vld [vmem:[%s288 + $0x160] sm:$0xff]
      %v1976 = vld [vmem:[%s288 + $0x168] sm:$0xff]
      %v1977 = vld [vmem:[%s288 + $0x170] sm:$0xff]
      %v1978 = vld [vmem:[%s288 + $0x178] sm:$0xff]
      %v1979 = vld [vmem:[%s288 + $0x180] sm:$0xff]
      %v1980 = vld [vmem:[%s288 + $0x188] sm:$0xff]
      %v1981 = vld [vmem:[%s288 + $0x190] sm:$0xff]
      %v1982 = vld [vmem:[%s288 + $0x198] sm:$0xff]
      %v1983 = vld [vmem:[%s288 + $0x1a0] sm:$0xff]
      %v1984 = vld [vmem:[%s288 + $0x1a8] sm:$0xff]
      %v1985 = vld [vmem:[%s288 + $0x1b0] sm:$0xff]
      %v1986 = vld [vmem:[%s288 + $0x1b8] sm:$0xff]
      %v1987 = vld [vmem:[%s288 + $0x1c0] sm:$0xff]
      %v1988 = vld [vmem:[%s288 + $0x1c8] sm:$0xff]
      %v1989 = vld [vmem:[%s288 + $0x1d0] sm:$0xff]
      %v1990 = vld [vmem:[%s288 + $0x1d8] sm:$0xff]
      %v1991 = vld [vmem:[%s288 + $0x1e0] sm:$0xff]
      %v1992 = vld [vmem:[%s288 + $0x1e8] sm:$0xff]
      %v1993 = vld [vmem:[%s288 + $0x1f0] sm:$0xff]
      %v1994 = vld [vmem:[%s288 + $0x1f8] sm:$0xff]
      %v1995 = vld [vmem:[%s288 + $0x200] sm:$0xff]
      %v1996 = vld [vmem:[%s288 + $0x208] sm:$0xff]
      %v1997 = vld [vmem:[%s288 + $0x210] sm:$0xff]
      %v1998 = vld [vmem:[%s288 + $0x218] sm:$0xff]
      %v1999 = vld [vmem:[%s288 + $0x220] sm:$0xff]
      %v2000 = vld [vmem:[%s288 + $0x228] sm:$0xff]
      %v2001 = vld [vmem:[%s288 + $0x230] sm:$0xff]
      %v2002 = vld [vmem:[%s288 + $0x238] sm:$0xff]
      %v2003 = vld [vmem:[%s288 + $0x240] sm:$0xff]
      %v2004 = vld [vmem:[%s288 + $0x248] sm:$0xff]
      %v2005 = vld [vmem:[%s288 + $0x250] sm:$0xff]
      %v2006 = vld [vmem:[%s288 + $0x258] sm:$0xff]
      %v2007 = vld [vmem:[%s288 + $0x260] sm:$0xff]
      %v2008 = vld [vmem:[%s288 + $0x268] sm:$0xff]
      %v2009 = vld [vmem:[%s288 + $0x270] sm:$0xff]
      %v2010 = vld [vmem:[%s288 + $0x278] sm:$0xff]
      %2012 = vset.pattern.permute.xlu0 0
      %2013 = vperm.xlu0 %2012, %v1931
      %v2014 = vpop.permute.xlu0 %2013
      %2017 = vset.pattern.permute.xlu0 0
      %2018 = vperm.xlu0 %2017, %v1932
      %v2019 = vpop.permute.xlu0 %2018
      %2022 = vset.pattern.permute.xlu0 0
      %2023 = vperm.xlu0 %2022, %v1933
      %v2024 = vpop.permute.xlu0 %2023
      %2027 = vset.pattern.permute.xlu0 0
      %2028 = vperm.xlu0 %2027, %v1934
      %v2029 = vpop.permute.xlu0 %2028
      %2032 = vset.pattern.permute.xlu0 0
      %2033 = vperm.xlu0 %2032, %v1935
      %v2034 = vpop.permute.xlu0 %2033
      %2037 = vset.pattern.permute.xlu0 0
      %2038 = vperm.xlu0 %2037, %v1936
      %v2039 = vpop.permute.xlu0 %2038
      %2042 = vset.pattern.permute.xlu0 0
      %2043 = vperm.xlu0 %2042, %v1937
      %v2044 = vpop.permute.xlu0 %2043
      %2047 = vset.pattern.permute.xlu0 0
      %2048 = vperm.xlu0 %2047, %v1938
      %v2049 = vpop.permute.xlu0 %2048
      %2052 = vset.pattern.permute.xlu0 0
      %2053 = vperm.xlu0 %2052, %v1939
      %v2054 = vpop.permute.xlu0 %2053
      %2057 = vset.pattern.permute.xlu0 0
      %2058 = vperm.xlu0 %2057, %v1940
      %v2059 = vpop.permute.xlu0 %2058
      %2062 = vset.pattern.permute.xlu0 0
      %2063 = vperm.xlu0 %2062, %v1941
      %v2064 = vpop.permute.xlu0 %2063
      %2067 = vset.pattern.permute.xlu0 0
      %2068 = vperm.xlu0 %2067, %v1942
      %v2069 = vpop.permute.xlu0 %2068
      %2072 = vset.pattern.permute.xlu0 0
      %2073 = vperm.xlu0 %2072, %v1943
      %v2074 = vpop.permute.xlu0 %2073
      %2077 = vset.pattern.permute.xlu0 0
      %2078 = vperm.xlu0 %2077, %v1944
      %v2079 = vpop.permute.xlu0 %2078
      %2082 = vset.pattern.permute.xlu0 0
      %2083 = vperm.xlu0 %2082, %v1945
      %v2084 = vpop.permute.xlu0 %2083
      %2087 = vset.pattern.permute.xlu0 0
      %2088 = vperm.xlu0 %2087, %v1946
      %v2089 = vpop.permute.xlu0 %2088
      %2092 = vset.pattern.permute.xlu0 0
      %2093 = vperm.xlu0 %2092, %v1947
      %v2094 = vpop.permute.xlu0 %2093
      %2097 = vset.pattern.permute.xlu0 0
      %2098 = vperm.xlu0 %2097, %v1948
      %v2099 = vpop.permute.xlu0 %2098
      %2102 = vset.pattern.permute.xlu0 0
      %2103 = vperm.xlu0 %2102, %v1949
      %v2104 = vpop.permute.xlu0 %2103
      %2107 = vset.pattern.permute.xlu0 0
      %2108 = vperm.xlu0 %2107, %v1950
      %v2109 = vpop.permute.xlu0 %2108
      %2112 = vset.pattern.permute.xlu0 0
      %2113 = vperm.xlu0 %2112, %v1951
      %v2114 = vpop.permute.xlu0 %2113
      %2117 = vset.pattern.permute.xlu0 0
      %2118 = vperm.xlu0 %2117, %v1952
      %v2119 = vpop.permute.xlu0 %2118
      %2122 = vset.pattern.permute.xlu0 0
      %2123 = vperm.xlu0 %2122, %v1953
      %v2124 = vpop.permute.xlu0 %2123
      %2127 = vset.pattern.permute.xlu0 0
      %2128 = vperm.xlu0 %2127, %v1954
      %v2129 = vpop.permute.xlu0 %2128
      %2132 = vset.pattern.permute.xlu0 0
      %2133 = vperm.xlu0 %2132, %v1955
      %v2134 = vpop.permute.xlu0 %2133
      %2137 = vset.pattern.permute.xlu0 0
      %2138 = vperm.xlu0 %2137, %v1956
      %v2139 = vpop.permute.xlu0 %2138
      %2142 = vset.pattern.permute.xlu0 0
      %2143 = vperm.xlu0 %2142, %v1957
      %v2144 = vpop.permute.xlu0 %2143
      %2147 = vset.pattern.permute.xlu0 0
      %2148 = vperm.xlu0 %2147, %v1958
      %v2149 = vpop.permute.xlu0 %2148
      %2152 = vset.pattern.permute.xlu0 0
      %2153 = vperm.xlu0 %2152, %v1959
      %v2154 = vpop.permute.xlu0 %2153
      %2157 = vset.pattern.permute.xlu0 0
      %2158 = vperm.xlu0 %2157, %v1960
      %v2159 = vpop.permute.xlu0 %2158
      %2162 = vset.pattern.permute.xlu0 0
      %2163 = vperm.xlu0 %2162, %v1961
      %v2164 = vpop.permute.xlu0 %2163
      %2167 = vset.pattern.permute.xlu0 0
      %2168 = vperm.xlu0 %2167, %v1962
      %v2169 = vpop.permute.xlu0 %2168
      %2172 = vset.pattern.permute.xlu0 0
      %2173 = vperm.xlu0 %2172, %v1963
      %v2174 = vpop.permute.xlu0 %2173
      %2177 = vset.pattern.permute.xlu0 0
      %2178 = vperm.xlu0 %2177, %v1964
      %v2179 = vpop.permute.xlu0 %2178
      %2182 = vset.pattern.permute.xlu0 0
      %2183 = vperm.xlu0 %2182, %v1965
      %v2184 = vpop.permute.xlu0 %2183
      %2187 = vset.pattern.permute.xlu0 0
      %2188 = vperm.xlu0 %2187, %v1966
      %v2189 = vpop.permute.xlu0 %2188
      %2192 = vset.pattern.permute.xlu0 0
      %2193 = vperm.xlu0 %2192, %v1967
      %v2194 = vpop.permute.xlu0 %2193
      %2197 = vset.pattern.permute.xlu0 0
      %2198 = vperm.xlu0 %2197, %v1968
      %v2199 = vpop.permute.xlu0 %2198
      %2202 = vset.pattern.permute.xlu0 0
      %2203 = vperm.xlu0 %2202, %v1969
      %v2204 = vpop.permute.xlu0 %2203
      %2207 = vset.pattern.permute.xlu0 0
      %2208 = vperm.xlu0 %2207, %v1970
      %v2209 = vpop.permute.xlu0 %2208
      %2212 = vset.pattern.permute.xlu0 0
      %2213 = vperm.xlu0 %2212, %v1971
      %v2214 = vpop.permute.xlu0 %2213
      %2217 = vset.pattern.permute.xlu0 0
      %2218 = vperm.xlu0 %2217, %v1972
      %v2219 = vpop.permute.xlu0 %2218
      %2222 = vset.pattern.permute.xlu0 0
      %2223 = vperm.xlu0 %2222, %v1973
      %v2224 = vpop.permute.xlu0 %2223
      %2227 = vset.pattern.permute.xlu0 0
      %2228 = vperm.xlu0 %2227, %v1974
      %v2229 = vpop.permute.xlu0 %2228
      %2232 = vset.pattern.permute.xlu0 0
      %2233 = vperm.xlu0 %2232, %v1975
      %v2234 = vpop.permute.xlu0 %2233
      %2237 = vset.pattern.permute.xlu0 0
      %2238 = vperm.xlu0 %2237, %v1976
      %v2239 = vpop.permute.xlu0 %2238
      %2242 = vset.pattern.permute.xlu0 0
      %2243 = vperm.xlu0 %2242, %v1977
      %v2244 = vpop.permute.xlu0 %2243
      %2247 = vset.pattern.permute.xlu0 0
      %2248 = vperm.xlu0 %2247, %v1978
      %v2249 = vpop.permute.xlu0 %2248
      %2252 = vset.pattern.permute.xlu0 0
      %2253 = vperm.xlu0 %2252, %v1979
      %v2254 = vpop.permute.xlu0 %2253
      %2257 = vset.pattern.permute.xlu0 0
      %2258 = vperm.xlu0 %2257, %v1980
      %v2259 = vpop.permute.xlu0 %2258
      %2262 = vset.pattern.permute.xlu0 0
      %2263 = vperm.xlu0 %2262, %v1981
      %v2264 = vpop.permute.xlu0 %2263
      %2267 = vset.pattern.permute.xlu0 0
      %2268 = vperm.xlu0 %2267, %v1982
      %v2269 = vpop.permute.xlu0 %2268
      %2272 = vset.pattern.permute.xlu0 0
      %2273 = vperm.xlu0 %2272, %v1983
      %v2274 = vpop.permute.xlu0 %2273
      %2277 = vset.pattern.permute.xlu0 0
      %2278 = vperm.xlu0 %2277, %v1984
      %v2279 = vpop.permute.xlu0 %2278
      %2282 = vset.pattern.permute.xlu0 0
      %2283 = vperm.xlu0 %2282, %v1985
      %v2284 = vpop.permute.xlu0 %2283
      %2287 = vset.pattern.permute.xlu0 0
      %2288 = vperm.xlu0 %2287, %v1986
      %v2289 = vpop.permute.xlu0 %2288
      %2292 = vset.pattern.permute.xlu0 0
      %2293 = vperm.xlu0 %2292, %v1987
      %v2294 = vpop.permute.xlu0 %2293
      %2297 = vset.pattern.permute.xlu0 0
      %2298 = vperm.xlu0 %2297, %v1988
      %v2299 = vpop.permute.xlu0 %2298
      %2302 = vset.pattern.permute.xlu0 0
      %2303 = vperm.xlu0 %2302, %v1989
      %v2304 = vpop.permute.xlu0 %2303
      %2307 = vset.pattern.permute.xlu0 0
      %2308 = vperm.xlu0 %2307, %v1990
      %v2309 = vpop.permute.xlu0 %2308
      %2312 = vset.pattern.permute.xlu0 0
      %2313 = vperm.xlu0 %2312, %v1991
      %v2314 = vpop.permute.xlu0 %2313
      %2317 = vset.pattern.permute.xlu0 0
      %2318 = vperm.xlu0 %2317, %v1992
      %v2319 = vpop.permute.xlu0 %2318
      %2322 = vset.pattern.permute.xlu0 0
      %2323 = vperm.xlu0 %2322, %v1993
      %v2324 = vpop.permute.xlu0 %2323
      %2327 = vset.pattern.permute.xlu0 0
      %2328 = vperm.xlu0 %2327, %v1994
      %v2329 = vpop.permute.xlu0 %2328
      %2332 = vset.pattern.permute.xlu0 0
      %2333 = vperm.xlu0 %2332, %v1995
      %v2334 = vpop.permute.xlu0 %2333
      %2337 = vset.pattern.permute.xlu0 0
      %2338 = vperm.xlu0 %2337, %v1996
      %v2339 = vpop.permute.xlu0 %2338
      %2342 = vset.pattern.permute.xlu0 0
      %2343 = vperm.xlu0 %2342, %v1997
      %v2344 = vpop.permute.xlu0 %2343
      %2347 = vset.pattern.permute.xlu0 0
      %2348 = vperm.xlu0 %2347, %v1998
      %v2349 = vpop.permute.xlu0 %2348
      %2352 = vset.pattern.permute.xlu0 0
      %2353 = vperm.xlu0 %2352, %v1999
      %v2354 = vpop.permute.xlu0 %2353
      %2357 = vset.pattern.permute.xlu0 0
      %2358 = vperm.xlu0 %2357, %v2000
      %v2359 = vpop.permute.xlu0 %2358
      %2362 = vset.pattern.permute.xlu0 0
      %2363 = vperm.xlu0 %2362, %v2001
      %v2364 = vpop.permute.xlu0 %2363
      %2367 = vset.pattern.permute.xlu0 0
      %2368 = vperm.xlu0 %2367, %v2002
      %v2369 = vpop.permute.xlu0 %2368
      %2372 = vset.pattern.permute.xlu0 0
      %2373 = vperm.xlu0 %2372, %v2003
      %v2374 = vpop.permute.xlu0 %2373
      %2377 = vset.pattern.permute.xlu0 0
      %2378 = vperm.xlu0 %2377, %v2004
      %v2379 = vpop.permute.xlu0 %2378
      %2382 = vset.pattern.permute.xlu0 0
      %2383 = vperm.xlu0 %2382, %v2005
      %v2384 = vpop.permute.xlu0 %2383
      %2387 = vset.pattern.permute.xlu0 0
      %2388 = vperm.xlu0 %2387, %v2006
      %v2389 = vpop.permute.xlu0 %2388
      %2392 = vset.pattern.permute.xlu0 0
      %2393 = vperm.xlu0 %2392, %v2007
      %v2394 = vpop.permute.xlu0 %2393
      %2397 = vset.pattern.permute.xlu0 0
      %2398 = vperm.xlu0 %2397, %v2008
      %v2399 = vpop.permute.xlu0 %2398
      %2402 = vset.pattern.permute.xlu0 0
      %2403 = vperm.xlu0 %2402, %v2009
      %v2404 = vpop.permute.xlu0 %2403
      %2407 = vset.pattern.permute.xlu0 0
      %2408 = vperm.xlu0 %2407, %v2010
      %v2409 = vpop.permute.xlu0 %2408
      %v2411 = vmul.f32 %v2014, %v299
      %v2412 = vmul.f32 %v2019, %v300
      %v2413 = vmul.f32 %v2024, %v301
      %v2414 = vmul.f32 %v2029, %v302
      %v2415 = vmul.f32 %v2034, %v303
      %v2416 = vmul.f32 %v2039, %v304
      %v2417 = vmul.f32 %v2044, %v305
      %v2418 = vmul.f32 %v2049, %v306
      %v2419 = vmul.f32 %v2054, %v307
      %v2420 = vmul.f32 %v2059, %v308
      %v2421 = vmul.f32 %v2064, %v309
      %v2422 = vmul.f32 %v2069, %v310
      %v2423 = vmul.f32 %v2074, %v311
      %v2424 = vmul.f32 %v2079, %v312
      %v2425 = vmul.f32 %v2084, %v313
      %v2426 = vmul.f32 %v2089, %v314
      %v2427 = vmul.f32 %v2094, %v315
      %v2428 = vmul.f32 %v2099, %v316
      %v2429 = vmul.f32 %v2104, %v317
      %v2430 = vmul.f32 %v2109, %v318
      %v2431 = vmul.f32 %v2114, %v319
      %v2432 = vmul.f32 %v2119, %v320
      %v2433 = vmul.f32 %v2124, %v321
      %v2434 = vmul.f32 %v2129, %v322
      %v2435 = vmul.f32 %v2134, %v323
      %v2436 = vmul.f32 %v2139, %v324
      %v2437 = vmul.f32 %v2144, %v325
      %v2438 = vmul.f32 %v2149, %v326
      %v2439 = vmul.f32 %v2154, %v327
      %v2440 = vmul.f32 %v2159, %v328
      %v2441 = vmul.f32 %v2164, %v329
      %v2442 = vmul.f32 %v2169, %v330
      %v2443 = vmul.f32 %v2174, %v331
      %v2444 = vmul.f32 %v2179, %v332
      %v2445 = vmul.f32 %v2184, %v333
      %v2446 = vmul.f32 %v2189, %v334
      %v2447 = vmul.f32 %v2194, %v335
      %v2448 = vmul.f32 %v2199, %v336
      %v2449 = vmul.f32 %v2204, %v337
      %v2450 = vmul.f32 %v2209, %v338
      %v2451 = vmul.f32 %v2214, %v339
      %v2452 = vmul.f32 %v2219, %v340
      %v2453 = vmul.f32 %v2224, %v341
      %v2454 = vmul.f32 %v2229, %v342
      %v2455 = vmul.f32 %v2234, %v343
      %v2456 = vmul.f32 %v2239, %v344
      %v2457 = vmul.f32 %v2244, %v345
      %v2458 = vmul.f32 %v2249, %v346
      %v2459 = vmul.f32 %v2254, %v347
      %v2460 = vmul.f32 %v2259, %v348
      %v2461 = vmul.f32 %v2264, %v349
      %v2462 = vmul.f32 %v2269, %v350
      %v2463 = vmul.f32 %v2274, %v351
      %v2464 = vmul.f32 %v2279, %v352
      %v2465 = vmul.f32 %v2284, %v353
      %v2466 = vmul.f32 %v2289, %v354
      %v2467 = vmul.f32 %v2294, %v355
      %v2468 = vmul.f32 %v2299, %v356
      %v2469 = vmul.f32 %v2304, %v357
      %v2470 = vmul.f32 %v2309, %v358
      %v2471 = vmul.f32 %v2314, %v359
      %v2472 = vmul.f32 %v2319, %v360
      %v2473 = vmul.f32 %v2324, %v361
      %v2474 = vmul.f32 %v2329, %v362
      %v2475 = vmul.f32 %v2334, %v363
      %v2476 = vmul.f32 %v2339, %v364
      %v2477 = vmul.f32 %v2344, %v365
      %v2478 = vmul.f32 %v2349, %v366
      %v2479 = vmul.f32 %v2354, %v367
      %v2480 = vmul.f32 %v2359, %v368
      %v2481 = vmul.f32 %v2364, %v369
      %v2482 = vmul.f32 %v2369, %v370
      %v2483 = vmul.f32 %v2374, %v371
      %v2484 = vmul.f32 %v2379, %v372
      %v2485 = vmul.f32 %v2384, %v373
      %v2486 = vmul.f32 %v2389, %v374
      %v2487 = vmul.f32 %v2394, %v375
      %v2488 = vmul.f32 %v2399, %v376
      %v2489 = vmul.f32 %v2404, %v377
      %v2490 = vmul.f32 %v2409, %v378
      %v2491 = vadd.f32 %v2411, %v1533
      %v2492 = vadd.f32 %v2412, %v1538
      %v2493 = vadd.f32 %v2413, %v1543
      %v2494 = vadd.f32 %v2414, %v1548
      %v2495 = vadd.f32 %v2415, %v1553
      %v2496 = vadd.f32 %v2416, %v1558
      %v2497 = vadd.f32 %v2417, %v1563
      %v2498 = vadd.f32 %v2418, %v1568
      %v2499 = vadd.f32 %v2419, %v1573
      %v2500 = vadd.f32 %v2420, %v1578
      %v2501 = vadd.f32 %v2421, %v1583
      %v2502 = vadd.f32 %v2422, %v1588
      %v2503 = vadd.f32 %v2423, %v1593
      %v2504 = vadd.f32 %v2424, %v1598
      %v2505 = vadd.f32 %v2425, %v1603
      %v2506 = vadd.f32 %v2426, %v1608
      %v2507 = vadd.f32 %v2427, %v1613
      %v2508 = vadd.f32 %v2428, %v1618
      %v2509 = vadd.f32 %v2429, %v1623
      %v2510 = vadd.f32 %v2430, %v1628
      %v2511 = vadd.f32 %v2431, %v1633
      %v2512 = vadd.f32 %v2432, %v1638
      %v2513 = vadd.f32 %v2433, %v1643
      %v2514 = vadd.f32 %v2434, %v1648
      %v2515 = vadd.f32 %v2435, %v1653
      %v2516 = vadd.f32 %v2436, %v1658
      %v2517 = vadd.f32 %v2437, %v1663
      %v2518 = vadd.f32 %v2438, %v1668
      %v2519 = vadd.f32 %v2439, %v1673
      %v2520 = vadd.f32 %v2440, %v1678
      %v2521 = vadd.f32 %v2441, %v1683
      %v2522 = vadd.f32 %v2442, %v1688
      %v2523 = vadd.f32 %v2443, %v1693
      %v2524 = vadd.f32 %v2444, %v1698
      %v2525 = vadd.f32 %v2445, %v1703
      %v2526 = vadd.f32 %v2446, %v1708
      %v2527 = vadd.f32 %v2447, %v1713
      %v2528 = vadd.f32 %v2448, %v1718
      %v2529 = vadd.f32 %v2449, %v1723
      %v2530 = vadd.f32 %v2450, %v1728
      %v2531 = vadd.f32 %v2451, %v1733
      %v2532 = vadd.f32 %v2452, %v1738
      %v2533 = vadd.f32 %v2453, %v1743
      %v2534 = vadd.f32 %v2454, %v1748
      %v2535 = vadd.f32 %v2455, %v1753
      %v2536 = vadd.f32 %v2456, %v1758
      %v2537 = vadd.f32 %v2457, %v1763
      %v2538 = vadd.f32 %v2458, %v1768
      %v2539 = vadd.f32 %v2459, %v1773
      %v2540 = vadd.f32 %v2460, %v1778
      %v2541 = vadd.f32 %v2461, %v1783
      %v2542 = vadd.f32 %v2462, %v1788
      %v2543 = vadd.f32 %v2463, %v1793
      %v2544 = vadd.f32 %v2464, %v1798
      %v2545 = vadd.f32 %v2465, %v1803
      %v2546 = vadd.f32 %v2466, %v1808
      %v2547 = vadd.f32 %v2467, %v1813
      %v2548 = vadd.f32 %v2468, %v1818
      %v2549 = vadd.f32 %v2469, %v1823
      %v2550 = vadd.f32 %v2470, %v1828
      %v2551 = vadd.f32 %v2471, %v1833
      %v2552 = vadd.f32 %v2472, %v1838
      %v2553 = vadd.f32 %v2473, %v1843
      %v2554 = vadd.f32 %v2474, %v1848
      %v2555 = vadd.f32 %v2475, %v1853
      %v2556 = vadd.f32 %v2476, %v1858
      %v2557 = vadd.f32 %v2477, %v1863
      %v2558 = vadd.f32 %v2478, %v1868
      %v2559 = vadd.f32 %v2479, %v1873
      %v2560 = vadd.f32 %v2480, %v1878
      %v2561 = vadd.f32 %v2481, %v1883
      %v2562 = vadd.f32 %v2482, %v1888
      %v2563 = vadd.f32 %v2483, %v1893
      %v2564 = vadd.f32 %v2484, %v1898
      %v2565 = vadd.f32 %v2485, %v1903
      %v2566 = vadd.f32 %v2486, %v1908
      %v2567 = vadd.f32 %v2487, %v1913
      %v2568 = vadd.f32 %v2488, %v1918
      %v2569 = vadd.f32 %v2489, %v1923
      %v2570 = vadd.f32 %v2490, %v1928
      %vm2571 = vcmask 261120
      %2572 = vst.msk [vmem:[%s298] sm:$0xff] %vm2571, %v2491
      %2573 = vst.msk [vmem:[%s298 + $0x8] sm:$0xff] %vm2571, %v2492
      %2574 = vst.msk [vmem:[%s298 + $0x10] sm:$0xff] %vm2571, %v2493
      %2575 = vst.msk [vmem:[%s298 + $0x18] sm:$0xff] %vm2571, %v2494
      %2576 = vst.msk [vmem:[%s298 + $0x20] sm:$0xff] %vm2571, %v2495
      %2577 = vst.msk [vmem:[%s298 + $0x28] sm:$0xff] %vm2571, %v2496
      %2578 = vst.msk [vmem:[%s298 + $0x30] sm:$0xff] %vm2571, %v2497
      %2579 = vst.msk [vmem:[%s298 + $0x38] sm:$0xff] %vm2571, %v2498
      %2580 = vst.msk [vmem:[%s298 + $0x40] sm:$0xff] %vm2571, %v2499
      %2581 = vst.msk [vmem:[%s298 + $0x48] sm:$0xff] %vm2571, %v2500
      %2582 = vst.msk [vmem:[%s298 + $0x50] sm:$0xff] %vm2571, %v2501
      %2583 = vst.msk [vmem:[%s298 + $0x58] sm:$0xff] %vm2571, %v2502
      %2584 = vst.msk [vmem:[%s298 + $0x60] sm:$0xff] %vm2571, %v2503
      %2585 = vst.msk [vmem:[%s298 + $0x68] sm:$0xff] %vm2571, %v2504
      %2586 = vst.msk [vmem:[%s298 + $0x70] sm:$0xff] %vm2571, %v2505
      %2587 = vst.msk [vmem:[%s298 + $0x78] sm:$0xff] %vm2571, %v2506
      %2588 = vst.msk [vmem:[%s298 + $0x80] sm:$0xff] %vm2571, %v2507
      %2589 = vst.msk [vmem:[%s298 + $0x88] sm:$0xff] %vm2571, %v2508
      %2590 = vst.msk [vmem:[%s298 + $0x90] sm:$0xff] %vm2571, %v2509
      %2591 = vst.msk [vmem:[%s298 + $0x98] sm:$0xff] %vm2571, %v2510
      %2592 = vst.msk [vmem:[%s298 + $0xa0] sm:$0xff] %vm2571, %v2511
      %2593 = vst.msk [vmem:[%s298 + $0xa8] sm:$0xff] %vm2571, %v2512
      %2594 = vst.msk [vmem:[%s298 + $0xb0] sm:$0xff] %vm2571, %v2513
      %2595 = vst.msk [vmem:[%s298 + $0xb8] sm:$0xff] %vm2571, %v2514
      %2596 = vst.msk [vmem:[%s298 + $0xc0] sm:$0xff] %vm2571, %v2515
      %2597 = vst.msk [vmem:[%s298 + $0xc8] sm:$0xff] %vm2571, %v2516
      %2598 = vst.msk [vmem:[%s298 + $0xd0] sm:$0xff] %vm2571, %v2517
      %2599 = vst.msk [vmem:[%s298 + $0xd8] sm:$0xff] %vm2571, %v2518
      %2600 = vst.msk [vmem:[%s298 + $0xe0] sm:$0xff] %vm2571, %v2519
      %2601 = vst.msk [vmem:[%s298 + $0xe8] sm:$0xff] %vm2571, %v2520
      %2602 = vst.msk [vmem:[%s298 + $0xf0] sm:$0xff] %vm2571, %v2521
      %2603 = vst.msk [vmem:[%s298 + $0xf8] sm:$0xff] %vm2571, %v2522
      %2604 = vst.msk [vmem:[%s298 + $0x100] sm:$0xff] %vm2571, %v2523
      %2605 = vst.msk [vmem:[%s298 + $0x108] sm:$0xff] %vm2571, %v2524
      %2606 = vst.msk [vmem:[%s298 + $0x110] sm:$0xff] %vm2571, %v2525
      %2607 = vst.msk [vmem:[%s298 + $0x118] sm:$0xff] %vm2571, %v2526
      %2608 = vst.msk [vmem:[%s298 + $0x120] sm:$0xff] %vm2571, %v2527
      %2609 = vst.msk [vmem:[%s298 + $0x128] sm:$0xff] %vm2571, %v2528
      %2610 = vst.msk [vmem:[%s298 + $0x130] sm:$0xff] %vm2571, %v2529
      %2611 = vst.msk [vmem:[%s298 + $0x138] sm:$0xff] %vm2571, %v2530
      %2612 = vst.msk [vmem:[%s298 + $0x140] sm:$0xff] %vm2571, %v2531
      %2613 = vst.msk [vmem:[%s298 + $0x148] sm:$0xff] %vm2571, %v2532
      %2614 = vst.msk [vmem:[%s298 + $0x150] sm:$0xff] %vm2571, %v2533
      %2615 = vst.msk [vmem:[%s298 + $0x158] sm:$0xff] %vm2571, %v2534
      %2616 = vst.msk [vmem:[%s298 + $0x160] sm:$0xff] %vm2571, %v2535
      %2617 = vst.msk [vmem:[%s298 + $0x168] sm:$0xff] %vm2571, %v2536
      %2618 = vst.msk [vmem:[%s298 + $0x170] sm:$0xff] %vm2571, %v2537
      %2619 = vst.msk [vmem:[%s298 + $0x178] sm:$0xff] %vm2571, %v2538
      %2620 = vst.msk [vmem:[%s298 + $0x180] sm:$0xff] %vm2571, %v2539
      %2621 = vst.msk [vmem:[%s298 + $0x188] sm:$0xff] %vm2571, %v2540
      %2622 = vst.msk [vmem:[%s298 + $0x190] sm:$0xff] %vm2571, %v2541
      %2623 = vst.msk [vmem:[%s298 + $0x198] sm:$0xff] %vm2571, %v2542
      %2624 = vst.msk [vmem:[%s298 + $0x1a0] sm:$0xff] %vm2571, %v2543
      %2625 = vst.msk [vmem:[%s298 + $0x1a8] sm:$0xff] %vm2571, %v2544
      %2626 = vst.msk [vmem:[%s298 + $0x1b0] sm:$0xff] %vm2571, %v2545
      %2627 = vst.msk [vmem:[%s298 + $0x1b8] sm:$0xff] %vm2571, %v2546
      %2628 = vst.msk [vmem:[%s298 + $0x1c0] sm:$0xff] %vm2571, %v2547
      %2629 = vst.msk [vmem:[%s298 + $0x1c8] sm:$0xff] %vm2571, %v2548
      %2630 = vst.msk [vmem:[%s298 + $0x1d0] sm:$0xff] %vm2571, %v2549
      %2631 = vst.msk [vmem:[%s298 + $0x1d8] sm:$0xff] %vm2571, %v2550
      %2632 = vst.msk [vmem:[%s298 + $0x1e0] sm:$0xff] %vm2571, %v2551
      %2633 = vst.msk [vmem:[%s298 + $0x1e8] sm:$0xff] %vm2571, %v2552
      %2634 = vst.msk [vmem:[%s298 + $0x1f0] sm:$0xff] %vm2571, %v2553
      %2635 = vst.msk [vmem:[%s298 + $0x1f8] sm:$0xff] %vm2571, %v2554
      %2636 = vst.msk [vmem:[%s298 + $0x200] sm:$0xff] %vm2571, %v2555
      %2637 = vst.msk [vmem:[%s298 + $0x208] sm:$0xff] %vm2571, %v2556
      %2638 = vst.msk [vmem:[%s298 + $0x210] sm:$0xff] %vm2571, %v2557
      %2639 = vst.msk [vmem:[%s298 + $0x218] sm:$0xff] %vm2571, %v2558
      %2640 = vst.msk [vmem:[%s298 + $0x220] sm:$0xff] %vm2571, %v2559
      %2641 = vst.msk [vmem:[%s298 + $0x228] sm:$0xff] %vm2571, %v2560
      %2642 = vst.msk [vmem:[%s298 + $0x230] sm:$0xff] %vm2571, %v2561
      %2643 = vst.msk [vmem:[%s298 + $0x238] sm:$0xff] %vm2571, %v2562
      %2644 = vst.msk [vmem:[%s298 + $0x240] sm:$0xff] %vm2571, %v2563
      %2645 = vst.msk [vmem:[%s298 + $0x248] sm:$0xff] %vm2571, %v2564
      %2646 = vst.msk [vmem:[%s298 + $0x250] sm:$0xff] %vm2571, %v2565
      %2647 = vst.msk [vmem:[%s298 + $0x258] sm:$0xff] %vm2571, %v2566
      %2648 = vst.msk [vmem:[%s298 + $0x260] sm:$0xff] %vm2571, %v2567
      %2649 = vst.msk [vmem:[%s298 + $0x268] sm:$0xff] %vm2571, %v2568
      %2650 = vst.msk [vmem:[%s298 + $0x270] sm:$0xff] %vm2571, %v2569
      %2651 = vst.msk [vmem:[%s298 + $0x278] sm:$0xff] %vm2571, %v2570
      %p2652 = scmp.lt.s32.totalorder %s16, 1
      %s2653 = scalar_select %p2652, %s16, 1
      %s2654 = smul.addr %s2653, 80
      %s2655 = smul.addr %s2654, 8
      %s2656 = scalar_lea.vmem %s5, %s2655
      // Predicated region
      $region41: #{graph_conv_layer.1} parent=39 // pred_check
        %p2657 = pneg %p164
      $region42: #{graph_conv_layer.1} parent=39 // pred_check_branch
        %2659 = sbr.rel (%p2657) target = $region44
      $region43: #{graph_conv_layer.1} parent=39 // pred_region
        _
      $region44: #{graph_conv_layer.1} parent=39 // pred_fallthru
        _
    $region40: #{graph_conv_layer.1} parent=5 // pred_fallthru
      _
    %p2660 = scmp.le.s32.totalorder 2, %s11
    // Predicated region
    $region45: #{graph_conv_layer.1} parent=5 // pred_check
      %p2661 = pneg %p2660
    $region46: #{graph_conv_layer.1} parent=5 // pred_check_branch
      %2663 = sbr.rel (%p2661) target = $region48
    $region47: #{graph_conv_layer.1} parent=5 // pred_region
      %s2664 = ssub.s32 %s11, 2
      // Predicated region
      $region49: #{graph_conv_layer.1} parent=47 // pred_check
        %p2665 = pneg %p170
      $region50: #{graph_conv_layer.1} parent=47 // pred_check_branch
        %2667 = sbr.rel (%p2665) target = $region52
      $region51: #{graph_conv_layer.1} parent=47 // pred_region
        %p2668 = scmp.lt.s32.totalorder %s17, 1
        %s2669 = scalar_select %p2668, %s17, 1
        %s2670 = smul.addr %s2669, 80
        %s2671 = smul.addr %s2670, 8
        %s2672 = scalar_lea.vmem %s5, %s2671
      $region52: #{graph_conv_layer.1} parent=47 // pred_fallthru
        _
    $region48: #{graph_conv_layer.1} parent=5 // pred_fallthru
      _
  $region6: #{graph_conv_layer.1} parent=0 // loop_footer
    %s15 = sadd.s32 1, %s11
  $region7: #{graph_conv_layer.1} parent=0 // loop_footer_branch
    %10 = sbr.rel target = $region3
  $region8: #{graph_conv_layer.1} parent=0 // loop_exit
    _

</llo_original>
